<compile_context>
chip_gen: v7x
topology: tpu7x:2x2x1
jax: 0.10.0
libtpu: 0.0.40
codegen_flags: <defaults>
</compile_context>

<pallas_src>
import math
from functools import partial

import jax
import jax.numpy as jnp
from jax.experimental import pallas as pl
from jax.experimental.pallas import tpu as pltpu


# ----------------------------- in-kernel helpers -----------------------------

def _layernorm(x, w, b, eps=1e-5):
    mu = jnp.mean(x, axis=-1, keepdims=True)
    var = jnp.mean(jnp.square(x - mu), axis=-1, keepdims=True)
    return (x - mu) * jax.lax.rsqrt(var + eps) * w + b


def _gelu_tanh(x):
    # matches nn.GELU(approximate='tanh')
    c = math.sqrt(2.0 / math.pi)
    return 0.5 * x * (1.0 + jnp.tanh(c * (x + 0.044715 * x * x * x)))


# ----------------------------- fused encoder kernel -----------------------------

def g_encoder_kernel(n_head,
                     x0_ref,
                     ln1_w_ref, ln1_b_ref,
                     wq_ref, bq_ref, wk_ref, bk_ref, wv_ref, bv_ref,
                     wap_ref, bap_ref,
                     ln2_w_ref, ln2_b_ref,
                     wfc_ref, bfc_ref, wmp_ref, bmp_ref,
                     lnf_w_ref, lnf_b_ref, lm_w_ref, fproj_ref,
                     out_ref,
                     x_acc):
    layer = pl.program_id(1)
    n_layer = pl.num_programs(1)

    # Load the embedded+PE activations into the resident VMEM accumulator once.
    @pl.when(layer == 0)
    def _():
        x_acc[...] = x0_ref[0]

    x = x_acc[...]                                # (T, C) f32 residual stream
    T, C = x.shape
    hs = C // n_head
    scale = 1.0 / math.sqrt(hs)

    # ---------------- attention: x = x + c_proj(attn(ln_1(x))) ----------------
    xn = _layernorm(x, ln1_w_ref[0], ln1_b_ref[0])
    xnT = xn.T.astype(jnp.bfloat16)               # (C, T), lane-dense over T

    def proj_t(w_ref, b_ref):
        # W is stored (out, in); compute W @ x^T -> (C_out, T), bias over rows.
        return (jnp.dot(w_ref[0], xnT, preferred_element_type=jnp.float32)
                + b_ref[0])

    # (C, T) -> (n_head, hs, T): pure sublane split, no lane shuffles.
    qT = proj_t(wq_ref, bq_ref).reshape(n_head, hs, T)   # q[h, d, t]
    kT = proj_t(wk_ref, bk_ref).reshape(n_head, hs, T)   # k[h, d, t]
    vT = proj_t(wv_ref, bv_ref).reshape(n_head, hs, T)   # v[h, d, t]

    q = jnp.swapaxes(qT, 1, 2)                            # (n_head, T, hs)
    att = jnp.einsum('hqd,hdk->hqk',
                     q.astype(jnp.bfloat16), kT.astype(jnp.bfloat16),
                     preferred_element_type=jnp.float32) * scale
    att = att - jnp.max(att, axis=-1, keepdims=True)
    att = jnp.exp(att)
    att = att * pl.reciprocal(jnp.sum(att, axis=-1, keepdims=True), approx=True)

    # yT[h, d, q] = sum_k v[h, d, k] * att[h, q, k]
    yT = jnp.einsum('hdk,hqk->hdq',
                    vT.astype(jnp.bfloat16), att.astype(jnp.bfloat16),
                    preferred_element_type=jnp.float32)   # (n_head, hs, T)
    y2d = yT.reshape(C, T).astype(jnp.bfloat16)           # heads merged = y^T
    attn_outT = (jnp.dot(wap_ref[0], y2d, preferred_element_type=jnp.float32)
                 + bap_ref[0])                            # (C, T)
    x = x + attn_outT.T                                   # (T, C)

    # ---------------- MLP: x = x + c_proj(gelu(c_fc(ln_2(x)))) ----------------
    xn2 = _layernorm(x, ln2_w_ref[0], ln2_b_ref[0]).astype(jnp.bfloat16)
    h = (jnp.dot(xn2, wfc_ref[0], preferred_element_type=jnp.float32)
         + bfc_ref[0])                                    # (T, 4C) f32
    h = _gelu_tanh(h).astype(jnp.bfloat16)
    y2 = (jnp.dot(h, wmp_ref[0], preferred_element_type=jnp.float32)
          + bmp_ref[0])                                   # (T, C) f32
    x = x + y2
    x_acc[...] = x

    # ---------------- final head (ln_f -> lm_head -> f_proj), last layer only --
    @pl.when(layer == n_layer - 1)
    def _():
        xf = _layernorm(x, lnf_w_ref[...], lnf_b_ref[...])
        s = jnp.sum(xf * lm_w_ref[...], axis=-1, keepdims=True)   # (T, 1)
        # f_proj (bias-free): out[c] = sum_t s[t] * f_proj_w[t, c]
        o = jnp.sum(s * fproj_ref[...], axis=0, keepdims=True)    # (1, C)
        out_ref[...] = o.reshape(1, 1, C)


# ----------------------------- parameter init -----------------------------

def make_positional_encoding(block_size, n_embd):
    position = jnp.arange(block_size, dtype=jnp.float32)[:, None]
    div_term = jnp.exp(jnp.arange(0, n_embd, 2, dtype=jnp.float32)
                       * (-math.log(10000.0) / n_embd))
    pe = jnp.zeros((block_size, n_embd), jnp.float32)
    pe = pe.at[:, 0::2].set(jnp.sin(position * div_term))
    pe = pe.at[:, 1::2].set(jnp.cos(position * div_term))
    return pe


LAYER_KEYS = ('ln1_w', 'ln1_b',
              'wq_t', 'bq', 'wk_t', 'bk', 'wv_t', 'bv',
              'wap_t', 'bap',
              'ln2_w', 'ln2_b',
              'w_fc', 'b_fc', 'w_mp', 'b_mp')
HEAD_KEYS = ('lnf_w', 'lnf_b', 'lm_w', 'f_proj_w')


def init_params(key, *, vocab_size, block_size, n_embd, n_head, n_layer):
    del n_head
    keys = iter(jax.random.split(key, 32))

    def dense(shape, dtype=jnp.bfloat16, scale=0.02):
        w = scale * jax.random.normal(next(keys), shape, dtype=jnp.float32)
        return w.astype(dtype)

    C, L = n_embd, n_layer
    return {
        'wte': dense((vocab_size, C), jnp.float32),
        'pe': make_positional_encoding(block_size, C),
        # ---- per-layer params stacked on a leading layer axis ----
        'ln1_w': jnp.ones((L, 1, C), jnp.float32),
        'ln1_b': jnp.zeros((L, 1, C), jnp.float32),
        'wq_t': dense((L, C, C)),                 # (out, in)  bf16
        'bq':   jnp.zeros((L, C, 1), jnp.float32),
        'wk_t': dense((L, C, C)),
        'bk':   jnp.zeros((L, C, 1), jnp.float32),
        'wv_t': dense((L, C, C)),
        'bv':   jnp.zeros((L, C, 1), jnp.float32),
        'wap_t': dense((L, C, C)),                # attn c_proj, (out, in)
        'bap':  jnp.zeros((L, C, 1), jnp.float32),
        'ln2_w': jnp.ones((L, 1, C), jnp.float32),
        'ln2_b': jnp.zeros((L, 1, C), jnp.float32),
        'w_fc': dense((L, C, 4 * C)),             # (in, out)
        'b_fc': jnp.zeros((L, 1, 4 * C), jnp.float32),
        'w_mp': dense((L, 4 * C, C)),             # (in, out)
        'b_mp': jnp.zeros((L, 1, C), jnp.float32),
        # ---- head ----
        'lnf_w': jnp.ones((1, C), jnp.float32),
        'lnf_b': jnp.zeros((1, C), jnp.float32),
        'lm_w': dense((1, C), jnp.float32),               # lm_head weight (out=1)
        'f_proj_w': dense((block_size, C), jnp.float32),  # (in=block_size, out=C)
    }


# ----------------------------- forward wrapper -----------------------------

def g_encoder_forward(idx, params, *, n_head, block_size):
    B, T = idx.shape
    # f_proj is Linear(block_size, n_embd) over the sequence axis -> needs T == block_size
    assert T == block_size, "G_Encoder head requires seq_len == block_size"
    C = params['wte'].shape[1]
    L = params['ln1_w'].shape[0]

    # glue: embedding lookup + positional encoding (dropout == identity in eval)
    x0 = jnp.take(params['wte'], idx, axis=0) + params['pe'][None, :T, :]  # (B,T,C) f32

    layer_args = [params[k] for k in LAYER_KEYS]
    head_args = [params[k] for k in HEAD_KEYS]

    def layer_spec(a):
        return pl.BlockSpec((1,) + a.shape[1:], lambda b, l: (l, 0, 0))

    def head_spec(a):
        return pl.BlockSpec(a.shape, lambda b, l: (0, 0))

    out = pl.pallas_call(
        partial(g_encoder_kernel, n_head),
        grid=(B, L),
        in_specs=[pl.BlockSpec((1, T, C), lambda b, l: (b, 0, 0))]
                 + [layer_spec(a) for a in layer_args]
                 + [head_spec(a) for a in head_args],
        out_specs=pl.BlockSpec((1, 1, C), lambda b, l: (b, 0, 0)),
        out_shape=jax.ShapeDtypeStruct((B, 1, C), jnp.float32),
        scratch_shapes=[pltpu.VMEM((T, C), jnp.float32)],  # resident residual stream
        compiler_params=pltpu.CompilerParams(
            # batch axis shards across TensorCores (v7x); layer axis is sequential.
            dimension_semantics=("parallel", "arbitrary")),
        # NOTE: demo shapes are tiny; for realistic (T, C) raise vmem_limit_bytes
        # and re-derive the batch tile per generation (64 MiB VMEM on v7x).
    )(x0, *layer_args, *head_args)
    return out.reshape(B, C)


# ----------------------------- main -----------------------------

if __name__ == "__main__":
    B = 2
    config = dict(vocab_size=64, block_size=8, n_embd=32, n_head=4, n_layer=2)

    key = jax.random.PRNGKey(0)
    pkey, ikey = jax.random.split(key)
    params = init_params(pkey, **config)

    idx = jax.random.randint(ikey, (B, config['block_size']), 0,
                             config['vocab_size'], dtype=jnp.int32)

    fwd = jax.jit(partial(g_encoder_forward,
                          n_head=config['n_head'],
                          block_size=config['block_size']))
    out = fwd(idx, params)
    out = jax.block_until_ready(out)

    assert out.shape == (B, config['n_embd'])
    assert bool(jnp.all(jnp.isfinite(out)))
    print("KERNEL_OK")
</pallas_src>

<mosaic_0001>
module attributes {stable_mosaic.version = 11 : i64} {
  func.func @g_encoder_kernel(%arg0: i32, %arg1: i32, %arg2: memref<1x8x32xf32, #tpu.memory_space<vmem>>, %arg3: memref<1x1x32xf32, #tpu.memory_space<vmem>>, %arg4: memref<1x1x32xf32, #tpu.memory_space<vmem>>, %arg5: memref<1x32x32xbf16, #tpu.memory_space<vmem>>, %arg6: memref<1x32x1xf32, #tpu.memory_space<vmem>>, %arg7: memref<1x32x32xbf16, #tpu.memory_space<vmem>>, %arg8: memref<1x32x1xf32, #tpu.memory_space<vmem>>, %arg9: memref<1x32x32xbf16, #tpu.memory_space<vmem>>, %arg10: memref<1x32x1xf32, #tpu.memory_space<vmem>>, %arg11: memref<1x32x32xbf16, #tpu.memory_space<vmem>>, %arg12: memref<1x32x1xf32, #tpu.memory_space<vmem>>, %arg13: memref<1x1x32xf32, #tpu.memory_space<vmem>>, %arg14: memref<1x1x32xf32, #tpu.memory_space<vmem>>, %arg15: memref<1x32x128xbf16, #tpu.memory_space<vmem>>, %arg16: memref<1x1x128xf32, #tpu.memory_space<vmem>>, %arg17: memref<1x128x32xbf16, #tpu.memory_space<vmem>>, %arg18: memref<1x1x32xf32, #tpu.memory_space<vmem>>, %arg19: memref<1x32xf32, #tpu.memory_space<vmem>>, %arg20: memref<1x32xf32, #tpu.memory_space<vmem>>, %arg21: memref<1x32xf32, #tpu.memory_space<vmem>>, %arg22: memref<8x32xf32, #tpu.memory_space<vmem>>, %arg23: memref<1x1x32xf32, #tpu.memory_space<vmem>>, %arg24: memref<8x32xf32, #tpu.memory_space<vmem>>) attributes {dimension_semantics = [#tpu.dimension_semantics<parallel>, #tpu.dimension_semantics<arbitrary>], iteration_bounds = array<i64: 2, 2>, scalar_prefetch = 0 : i64, scratch_operands = 1 : i64, tpu.core_type = #tpu.core_type<tc>, window_params = [{transform_indices = @transform_0, window_bounds = array<i64: 1, 8, 32>}, {transform_indices = @transform_1, window_bounds = array<i64: 1, 1, 32>}, {transform_indices = @transform_2, window_bounds = array<i64: 1, 1, 32>}, {transform_indices = @transform_3, window_bounds = array<i64: 1, 32, 32>}, {transform_indices = @transform_4, window_bounds = array<i64: 1, 32, 1>}, {transform_indices = @transform_5, window_bounds = array<i64: 1, 32, 32>}, {transform_indices = @transform_6, window_bounds = array<i64: 1, 32, 1>}, {transform_indices = @transform_7, window_bounds = array<i64: 1, 32, 32>}, {transform_indices = @transform_8, window_bounds = array<i64: 1, 32, 1>}, {transform_indices = @transform_9, window_bounds = array<i64: 1, 32, 32>}, {transform_indices = @transform_10, window_bounds = array<i64: 1, 32, 1>}, {transform_indices = @transform_11, window_bounds = array<i64: 1, 1, 32>}, {transform_indices = @transform_12, window_bounds = array<i64: 1, 1, 32>}, {transform_indices = @transform_13, window_bounds = array<i64: 1, 32, 128>}, {transform_indices = @transform_14, window_bounds = array<i64: 1, 1, 128>}, {transform_indices = @transform_15, window_bounds = array<i64: 1, 128, 32>}, {transform_indices = @transform_16, window_bounds = array<i64: 1, 1, 32>}, {pipeline_mode = #tpu.pipeline_mode<synchronous>, transform_indices = @transform_17, window_bounds = array<i64: 1, 32>}, {pipeline_mode = #tpu.pipeline_mode<synchronous>, transform_indices = @transform_18, window_bounds = array<i64: 1, 32>}, {pipeline_mode = #tpu.pipeline_mode<synchronous>, transform_indices = @transform_19, window_bounds = array<i64: 1, 32>}, {pipeline_mode = #tpu.pipeline_mode<synchronous>, transform_indices = @transform_20, window_bounds = array<i64: 8, 32>}, {transform_indices = @transform_21, window_bounds = array<i64: 1, 1, 32>}]} {
    %c0_i32 = arith.constant 0 : i32
    %0 = arith.cmpi eq, %arg1, %c0_i32 : i32
    %1 = arith.extui %0 : i1 to i32
    %c0_i32_0 = arith.constant 0 : i32
    %2 = arith.cmpi ne, %1, %c0_i32_0 : i32
    scf.if %2 {
      %c0_77 = arith.constant 0 : index
      %c0_78 = arith.constant 0 : index
      %c0_79 = arith.constant 0 : index
      %146 = vector.load %arg2[%c0_77, %c0_78, %c0_79] : memref<1x8x32xf32, #tpu.memory_space<vmem>>, vector<1x8x32xf32>
      %147 = vector.shape_cast %146 : vector<1x8x32xf32> to vector<8x32xf32>
      %c0_80 = arith.constant 0 : index
      %c0_81 = arith.constant 0 : index
      %148 = vector.load %arg24[%c0_80, %c0_81] : memref<8x32xf32, #tpu.memory_space<vmem>>, vector<8x32xf32>
      tpu.vector_store %arg24[%c0_80, %c0_81], %147 {strides = array<i32>} : memref<8x32xf32, #tpu.memory_space<vmem>>, vector<8x32xf32>,
    } else {
    }
    %c0 = arith.constant 0 : index
    %c0_1 = arith.constant 0 : index
    %3 = vector.load %arg24[%c0, %c0_1] : memref<8x32xf32, #tpu.memory_space<vmem>>, vector<8x32xf32>
    %c0_2 = arith.constant 0 : index
    %c0_3 = arith.constant 0 : index
    %c0_4 = arith.constant 0 : index
    %4 = vector.load %arg3[%c0_2, %c0_3, %c0_4] : memref<1x1x32xf32, #tpu.memory_space<vmem>>, vector<1x1x32xf32>
    %5 = vector.shape_cast %4 : vector<1x1x32xf32> to vector<1x32xf32>
    %c0_5 = arith.constant 0 : index
    %c0_6 = arith.constant 0 : index
    %c0_7 = arith.constant 0 : index
    %6 = vector.load %arg4[%c0_5, %c0_6, %c0_7] : memref<1x1x32xf32, #tpu.memory_space<vmem>>, vector<1x1x32xf32>
    %7 = vector.shape_cast %6 : vector<1x1x32xf32> to vector<1x32xf32>
    %cst = arith.constant dense<0.000000e+00> : vector<8xf32>
    %8 = vector.multi_reduction <add>, %3, %cst [1] : vector<8x32xf32> to vector<8xf32>
    %9 = vector.shape_cast %8 : vector<8xf32> to vector<8x1xf32>
    %cst_8 = arith.constant 3.200000e+01 : f32
    %10 = vector.broadcast %cst_8 : f32 to vector<8x1xf32>
    %11 = arith.divf %9, %10 : vector<8x1xf32>
    %12 = vector.broadcast %11 : vector<8x1xf32> to vector<8x32xf32>
    %13 = arith.subf %3, %12 : vector<8x32xf32>
    %14 = arith.mulf %13, %13 : vector<8x32xf32>
    %cst_9 = arith.constant dense<0.000000e+00> : vector<8xf32>
    %15 = vector.multi_reduction <add>, %14, %cst_9 [1] : vector<8x32xf32> to vector<8xf32>
    %16 = vector.shape_cast %15 : vector<8xf32> to vector<8x1xf32>
    %cst_10 = arith.constant 3.200000e+01 : f32
    %17 = vector.broadcast %cst_10 : f32 to vector<8x1xf32>
    %18 = arith.divf %16, %17 : vector<8x1xf32>
    %19 = vector.broadcast %11 : vector<8x1xf32> to vector<8x32xf32>
    %20 = arith.subf %3, %19 : vector<8x32xf32>
    %cst_11 = arith.constant 9.99999974E-6 : f32
    %21 = vector.broadcast %cst_11 : f32 to vector<8x1xf32>
    %22 = arith.addf %18, %21 : vector<8x1xf32>
    %23 = math.rsqrt %22 : vector<8x1xf32>
    %24 = vector.broadcast %23 : vector<8x1xf32> to vector<8x32xf32>
    %25 = arith.mulf %20, %24 : vector<8x32xf32>
    %26 = vector.broadcast %5 : vector<1x32xf32> to vector<8x32xf32>
    %27 = arith.mulf %25, %26 : vector<8x32xf32>
    %28 = vector.broadcast %7 : vector<1x32xf32> to vector<8x32xf32>
    %29 = arith.addf %27, %28 : vector<8x32xf32>
    %30 = tpu.transpose %29, [1, 0] : vector<8x32xf32> -> vector<32x8xf32>
    %31 = arith.truncf %30 : vector<32x8xf32> to vector<32x8xbf16>
    %c0_12 = arith.constant 0 : index
    %c0_13 = arith.constant 0 : index
    %c0_14 = arith.constant 0 : index
    %32 = vector.load %arg5[%c0_12, %c0_13, %c0_14] : memref<1x32x32xbf16, #tpu.memory_space<vmem>>, vector<1x32x32xbf16>
    %33 = vector.shape_cast %32 : vector<1x32x32xbf16> to vector<32x32xbf16>
    %cst_15 = arith.constant dense<0.000000e+00> : vector<32x8xf32>
    %34 = tpu.matmul %33, %31, %cst_15 {dimension_numbers = #tpu.dot_dimension_numbers<[1], [0], [0], [1], [0, 0, 1, 1], [], []>} : vector<32x32xbf16>, vector<32x8xbf16>, vector<32x8xf32> -> vector<32x8xf32>
    %c0_16 = arith.constant 0 : index
    %c0_17 = arith.constant 0 : index
    %c0_18 = arith.constant 0 : index
    %35 = vector.load %arg6[%c0_16, %c0_17, %c0_18] : memref<1x32x1xf32, #tpu.memory_space<vmem>>, vector<1x32x1xf32>
    %36 = vector.shape_cast %35 : vector<1x32x1xf32> to vector<32x1xf32>
    %37 = vector.broadcast %36 : vector<32x1xf32> to vector<32x8xf32>
    %38 = arith.addf %34, %37 : vector<32x8xf32>
    %39 = vector.shape_cast %38 : vector<32x8xf32> to vector<4x8x8xf32>
    %c0_19 = arith.constant 0 : index
    %c0_20 = arith.constant 0 : index
    %c0_21 = arith.constant 0 : index
    %40 = vector.load %arg7[%c0_19, %c0_20, %c0_21] : memref<1x32x32xbf16, #tpu.memory_space<vmem>>, vector<1x32x32xbf16>
    %41 = vector.shape_cast %40 : vector<1x32x32xbf16> to vector<32x32xbf16>
    %cst_22 = arith.constant dense<0.000000e+00> : vector<32x8xf32>
    %42 = tpu.matmul %41, %31, %cst_22 {dimension_numbers = #tpu.dot_dimension_numbers<[1], [0], [0], [1], [0, 0, 1, 1], [], []>} : vector<32x32xbf16>, vector<32x8xbf16>, vector<32x8xf32> -> vector<32x8xf32>
    %c0_23 = arith.constant 0 : index
    %c0_24 = arith.constant 0 : index
    %c0_25 = arith.constant 0 : index
    %43 = vector.load %arg8[%c0_23, %c0_24, %c0_25] : memref<1x32x1xf32, #tpu.memory_space<vmem>>, vector<1x32x1xf32>
    %44 = vector.shape_cast %43 : vector<1x32x1xf32> to vector<32x1xf32>
    %45 = vector.broadcast %44 : vector<32x1xf32> to vector<32x8xf32>
    %46 = arith.addf %42, %45 : vector<32x8xf32>
    %47 = vector.shape_cast %46 : vector<32x8xf32> to vector<4x8x8xf32>
    %c0_26 = arith.constant 0 : index
    %c0_27 = arith.constant 0 : index
    %c0_28 = arith.constant 0 : index
    %48 = vector.load %arg9[%c0_26, %c0_27, %c0_28] : memref<1x32x32xbf16, #tpu.memory_space<vmem>>, vector<1x32x32xbf16>
    %49 = vector.shape_cast %48 : vector<1x32x32xbf16> to vector<32x32xbf16>
    %cst_29 = arith.constant dense<0.000000e+00> : vector<32x8xf32>
    %50 = tpu.matmul %49, %31, %cst_29 {dimension_numbers = #tpu.dot_dimension_numbers<[1], [0], [0], [1], [0, 0, 1, 1], [], []>} : vector<32x32xbf16>, vector<32x8xbf16>, vector<32x8xf32> -> vector<32x8xf32>
    %c0_30 = arith.constant 0 : index
    %c0_31 = arith.constant 0 : index
    %c0_32 = arith.constant 0 : index
    %51 = vector.load %arg10[%c0_30, %c0_31, %c0_32] : memref<1x32x1xf32, #tpu.memory_space<vmem>>, vector<1x32x1xf32>
    %52 = vector.shape_cast %51 : vector<1x32x1xf32> to vector<32x1xf32>
    %53 = vector.broadcast %52 : vector<32x1xf32> to vector<32x8xf32>
    %54 = arith.addf %50, %53 : vector<32x8xf32>
    %55 = vector.shape_cast %54 : vector<32x8xf32> to vector<4x8x8xf32>
    %56 = tpu.transpose %39, [0, 2, 1] : vector<4x8x8xf32> -> vector<4x8x8xf32>
    %57 = arith.truncf %56 : vector<4x8x8xf32> to vector<4x8x8xbf16>
    %58 = arith.truncf %47 : vector<4x8x8xf32> to vector<4x8x8xbf16>
    "tpu.trace_start"() <{level = 10 : i32, message = "hqd,hdk->hqk"}> : () -> ()
    %cst_33 = arith.constant dense<0.000000e+00> : vector<4x8x8xf32>
    %59 = tpu.matmul %57, %58, %cst_33 {dimension_numbers = #tpu.dot_dimension_numbers<[2], [1], [1], [2], [0, 0, 0, 1, 1, 2], [0], [0]>} : vector<4x8x8xbf16>, vector<4x8x8xbf16>, vector<4x8x8xf32> -> vector<4x8x8xf32>
    "tpu.trace_stop"() : () -> ()
    %cst_34 = arith.constant 0.353553385 : f32
    %60 = vector.broadcast %cst_34 : f32 to vector<4x8x8xf32>
    %61 = arith.mulf %59, %60 : vector<4x8x8xf32>
    %cst_35 = arith.constant dense<0xFF800000> : vector<4x8xf32>
    %62 = vector.multi_reduction <maximumf>, %61, %cst_35 [2] : vector<4x8x8xf32> to vector<4x8xf32>
    %63 = vector.shape_cast %62 : vector<4x8xf32> to vector<4x8x1xf32>
    %64 = vector.broadcast %63 : vector<4x8x1xf32> to vector<4x8x8xf32>
    %65 = arith.subf %61, %64 : vector<4x8x8xf32>
    %66 = math.exp %65 : vector<4x8x8xf32>
    %cst_36 = arith.constant dense<0.000000e+00> : vector<4x8xf32>
    %67 = vector.multi_reduction <add>, %66, %cst_36 [2] : vector<4x8x8xf32> to vector<4x8xf32>
    %68 = vector.shape_cast %67 : vector<4x8xf32> to vector<4x8x1xf32>
    %69 = tpu.reciprocal %68 {approx = true} : vector<4x8x1xf32> -> vector<4x8x1xf32>
    %70 = vector.broadcast %69 : vector<4x8x1xf32> to vector<4x8x8xf32>
    %71 = arith.mulf %66, %70 : vector<4x8x8xf32>
    %72 = arith.truncf %55 : vector<4x8x8xf32> to vector<4x8x8xbf16>
    %73 = arith.truncf %71 : vector<4x8x8xf32> to vector<4x8x8xbf16>
    "tpu.trace_start"() <{level = 10 : i32, message = "hdk,hqk->hdq"}> : () -> ()
    %cst_37 = arith.constant dense<0.000000e+00> : vector<4x8x8xf32>
    %74 = tpu.matmul %72, %73, %cst_37 {dimension_numbers = #tpu.dot_dimension_numbers<[2], [2], [1], [1], [0, 0, 0, 1, 1, 1], [0], [0]>} : vector<4x8x8xbf16>, vector<4x8x8xbf16>, vector<4x8x8xf32> -> vector<4x8x8xf32>
    "tpu.trace_stop"() : () -> ()
    %75 = vector.shape_cast %74 : vector<4x8x8xf32> to vector<32x8xf32>
    %76 = arith.truncf %75 : vector<32x8xf32> to vector<32x8xbf16>
    %c0_38 = arith.constant 0 : index
    %c0_39 = arith.constant 0 : index
    %c0_40 = arith.constant 0 : index
    %77 = vector.load %arg11[%c0_38, %c0_39, %c0_40] : memref<1x32x32xbf16, #tpu.memory_space<vmem>>, vector<1x32x32xbf16>
    %78 = vector.shape_cast %77 : vector<1x32x32xbf16> to vector<32x32xbf16>
    %cst_41 = arith.constant dense<0.000000e+00> : vector<32x8xf32>
    %79 = tpu.matmul %78, %76, %cst_41 {dimension_numbers = #tpu.dot_dimension_numbers<[1], [0], [0], [1], [0, 0, 1, 1], [], []>} : vector<32x32xbf16>, vector<32x8xbf16>, vector<32x8xf32> -> vector<32x8xf32>
    %c0_42 = arith.constant 0 : index
    %c0_43 = arith.constant 0 : index
    %c0_44 = arith.constant 0 : index
    %80 = vector.load %arg12[%c0_42, %c0_43, %c0_44] : memref<1x32x1xf32, #tpu.memory_space<vmem>>, vector<1x32x1xf32>
    %81 = vector.shape_cast %80 : vector<1x32x1xf32> to vector<32x1xf32>
    %82 = vector.broadcast %81 : vector<32x1xf32> to vector<32x8xf32>
    %83 = arith.addf %79, %82 : vector<32x8xf32>
    %84 = tpu.transpose %83, [1, 0] : vector<32x8xf32> -> vector<8x32xf32>
    %85 = arith.addf %3, %84 : vector<8x32xf32>
    %c0_45 = arith.constant 0 : index
    %c0_46 = arith.constant 0 : index
    %c0_47 = arith.constant 0 : index
    %86 = vector.load %arg13[%c0_45, %c0_46, %c0_47] : memref<1x1x32xf32, #tpu.memory_space<vmem>>, vector<1x1x32xf32>
    %87 = vector.shape_cast %86 : vector<1x1x32xf32> to vector<1x32xf32>
    %c0_48 = arith.constant 0 : index
    %c0_49 = arith.constant 0 : index
    %c0_50 = arith.constant 0 : index
    %88 = vector.load %arg14[%c0_48, %c0_49, %c0_50] : memref<1x1x32xf32, #tpu.memory_space<vmem>>, vector<1x1x32xf32>
    %89 = vector.shape_cast %88 : vector<1x1x32xf32> to vector<1x32xf32>
    %cst_51 = arith.constant dense<0.000000e+00> : vector<8xf32>
    %90 = vector.multi_reduction <add>, %85, %cst_51 [1] : vector<8x32xf32> to vector<8xf32>
    %91 = vector.shape_cast %90 : vector<8xf32> to vector<8x1xf32>
    %cst_52 = arith.constant 3.200000e+01 : f32
    %92 = vector.broadcast %cst_52 : f32 to vector<8x1xf32>
    %93 = arith.divf %91, %92 : vector<8x1xf32>
    %94 = vector.broadcast %93 : vector<8x1xf32> to vector<8x32xf32>
    %95 = arith.subf %85, %94 : vector<8x32xf32>
    %96 = arith.mulf %95, %95 : vector<8x32xf32>
    %cst_53 = arith.constant dense<0.000000e+00> : vector<8xf32>
    %97 = vector.multi_reduction <add>, %96, %cst_53 [1] : vector<8x32xf32> to vector<8xf32>
    %98 = vector.shape_cast %97 : vector<8xf32> to vector<8x1xf32>
    %cst_54 = arith.constant 3.200000e+01 : f32
    %99 = vector.broadcast %cst_54 : f32 to vector<8x1xf32>
    %100 = arith.divf %98, %99 : vector<8x1xf32>
    %101 = vector.broadcast %93 : vector<8x1xf32> to vector<8x32xf32>
    %102 = arith.subf %85, %101 : vector<8x32xf32>
    %cst_55 = arith.constant 9.99999974E-6 : f32
    %103 = vector.broadcast %cst_55 : f32 to vector<8x1xf32>
    %104 = arith.addf %100, %103 : vector<8x1xf32>
    %105 = math.rsqrt %104 : vector<8x1xf32>
    %106 = vector.broadcast %105 : vector<8x1xf32> to vector<8x32xf32>
    %107 = arith.mulf %102, %106 : vector<8x32xf32>
    %108 = vector.broadcast %87 : vector<1x32xf32> to vector<8x32xf32>
    %109 = arith.mulf %107, %108 : vector<8x32xf32>
    %110 = vector.broadcast %89 : vector<1x32xf32> to vector<8x32xf32>
    %111 = arith.addf %109, %110 : vector<8x32xf32>
    %112 = arith.truncf %111 : vector<8x32xf32> to vector<8x32xbf16>
    %c0_56 = arith.constant 0 : index
    %c0_57 = arith.constant 0 : index
    %c0_58 = arith.constant 0 : index
    %113 = vector.load %arg15[%c0_56, %c0_57, %c0_58] : memref<1x32x128xbf16, #tpu.memory_space<vmem>>, vector<1x32x128xbf16>
    %114 = vector.shape_cast %113 : vector<1x32x128xbf16> to vector<32x128xbf16>
    %cst_59 = arith.constant dense<0.000000e+00> : vector<8x128xf32>
    %115 = tpu.matmul %112, %114, %cst_59 {dimension_numbers = #tpu.dot_dimension_numbers<[1], [0], [0], [1], [0, 0, 1, 1], [], []>} : vector<8x32xbf16>, vector<32x128xbf16>, vector<8x128xf32> -> vector<8x128xf32>
    %c0_60 = arith.constant 0 : index
    %c0_61 = arith.constant 0 : index
    %c0_62 = arith.constant 0 : index
    %116 = vector.load %arg16[%c0_60, %c0_61, %c0_62] : memref<1x1x128xf32, #tpu.memory_space<vmem>>, vector<1x1x128xf32>
    %117 = vector.shape_cast %116 : vector<1x1x128xf32> to vector<1x128xf32>
    %118 = vector.broadcast %117 : vector<1x128xf32> to vector<8x128xf32>
    %119 = arith.addf %115, %118 : vector<8x128xf32>
    %cst_63 = arith.constant 5.000000e-01 : f32
    %120 = vector.broadcast %cst_63 : f32 to vector<8x128xf32>
    %121 = arith.mulf %120, %119 : vector<8x128xf32>
    %cst_64 = arith.constant 4.471500e-02 : f32
    %122 = vector.broadcast %cst_64 : f32 to vector<8x128xf32>
    %123 = arith.mulf %122, %119 : vector<8x128xf32>
    %124 = arith.mulf %123, %119 : vector<8x128xf32>
    %125 = arith.mulf %124, %119 : vector<8x128xf32>
    %126 = arith.addf %119, %125 : vector<8x128xf32>
    %cst_65 = arith.constant 0.797884583 : f32
    %127 = vector.broadcast %cst_65 : f32 to vector<8x128xf32>
    %128 = arith.mulf %127, %126 : vector<8x128xf32>
    %129 = math.tanh %128 : vector<8x128xf32>
    %cst_66 = arith.constant 1.000000e+00 : f32
    %130 = vector.broadcast %cst_66 : f32 to vector<8x128xf32>
    %131 = arith.addf %130, %129 : vector<8x128xf32>
    %132 = arith.mulf %121, %131 : vector<8x128xf32>
    %133 = arith.truncf %132 : vector<8x128xf32> to vector<8x128xbf16>
    %c0_67 = arith.constant 0 : index
    %c0_68 = arith.constant 0 : index
    %c0_69 = arith.constant 0 : index
    %134 = vector.load %arg17[%c0_67, %c0_68, %c0_69] : memref<1x128x32xbf16, #tpu.memory_space<vmem>>, vector<1x128x32xbf16>
    %135 = vector.shape_cast %134 : vector<1x128x32xbf16> to vector<128x32xbf16>
    %cst_70 = arith.constant dense<0.000000e+00> : vector<8x32xf32>
    %136 = tpu.matmul %133, %135, %cst_70 {dimension_numbers = #tpu.dot_dimension_numbers<[1], [0], [0], [1], [0, 0, 1, 1], [], []>} : vector<8x128xbf16>, vector<128x32xbf16>, vector<8x32xf32> -> vector<8x32xf32>
    %c0_71 = arith.constant 0 : index
    %c0_72 = arith.constant 0 : index
    %c0_73 = arith.constant 0 : index
    %137 = vector.load %arg18[%c0_71, %c0_72, %c0_73] : memref<1x1x32xf32, #tpu.memory_space<vmem>>, vector<1x1x32xf32>
    %138 = vector.shape_cast %137 : vector<1x1x32xf32> to vector<1x32xf32>
    %139 = vector.broadcast %138 : vector<1x32xf32> to vector<8x32xf32>
    %140 = arith.addf %136, %139 : vector<8x32xf32>
    %141 = arith.addf %85, %140 : vector<8x32xf32>
    %c0_74 = arith.constant 0 : index
    %c0_75 = arith.constant 0 : index
    %142 = vector.load %arg24[%c0_74, %c0_75] : memref<8x32xf32, #tpu.memory_space<vmem>>, vector<8x32xf32>
    tpu.vector_store %arg24[%c0_74, %c0_75], %141 {strides = array<i32>} : memref<8x32xf32, #tpu.memory_space<vmem>>, vector<8x32xf32>,
    %c1_i32 = arith.constant 1 : i32
    %143 = arith.cmpi eq, %arg1, %c1_i32 : i32
    %144 = arith.extui %143 : i1 to i32
    %c0_i32_76 = arith.constant 0 : i32
    %145 = arith.cmpi ne, %144, %c0_i32_76 : i32
    scf.if %145 {
      %c0_77 = arith.constant 0 : index
      %c0_78 = arith.constant 0 : index
      %146 = vector.load %arg19[%c0_77, %c0_78] : memref<1x32xf32, #tpu.memory_space<vmem>>, vector<1x32xf32>
      %c0_79 = arith.constant 0 : index
      %c0_80 = arith.constant 0 : index
      %147 = vector.load %arg20[%c0_79, %c0_80] : memref<1x32xf32, #tpu.memory_space<vmem>>, vector<1x32xf32>
      %cst_81 = arith.constant dense<0.000000e+00> : vector<8xf32>
      %148 = vector.multi_reduction <add>, %141, %cst_81 [1] : vector<8x32xf32> to vector<8xf32>
      %149 = vector.shape_cast %148 : vector<8xf32> to vector<8x1xf32>
      %cst_82 = arith.constant 3.200000e+01 : f32
      %150 = vector.broadcast %cst_82 : f32 to vector<8x1xf32>
      %151 = arith.divf %149, %150 : vector<8x1xf32>
      %152 = vector.broadcast %151 : vector<8x1xf32> to vector<8x32xf32>
      %153 = arith.subf %141, %152 : vector<8x32xf32>
      %154 = arith.mulf %153, %153 : vector<8x32xf32>
      %cst_83 = arith.constant dense<0.000000e+00> : vector<8xf32>
      %155 = vector.multi_reduction <add>, %154, %cst_83 [1] : vector<8x32xf32> to vector<8xf32>
      %156 = vector.shape_cast %155 : vector<8xf32> to vector<8x1xf32>
      %cst_84 = arith.constant 3.200000e+01 : f32
      %157 = vector.broadcast %cst_84 : f32 to vector<8x1xf32>
      %158 = arith.divf %156, %157 : vector<8x1xf32>
      %159 = vector.broadcast %151 : vector<8x1xf32> to vector<8x32xf32>
      %160 = arith.subf %141, %159 : vector<8x32xf32>
      %cst_85 = arith.constant 9.99999974E-6 : f32
      %161 = vector.broadcast %cst_85 : f32 to vector<8x1xf32>
      %162 = arith.addf %158, %161 : vector<8x1xf32>
      %163 = math.rsqrt %162 : vector<8x1xf32>
      %164 = vector.broadcast %163 : vector<8x1xf32> to vector<8x32xf32>
      %165 = arith.mulf %160, %164 : vector<8x32xf32>
      %166 = vector.broadcast %146 : vector<1x32xf32> to vector<8x32xf32>
      %167 = arith.mulf %165, %166 : vector<8x32xf32>
      %168 = vector.broadcast %147 : vector<1x32xf32> to vector<8x32xf32>
      %169 = arith.addf %167, %168 : vector<8x32xf32>
      %c0_86 = arith.constant 0 : index
      %c0_87 = arith.constant 0 : index
      %170 = vector.load %arg21[%c0_86, %c0_87] : memref<1x32xf32, #tpu.memory_space<vmem>>, vector<1x32xf32>
      %171 = vector.broadcast %170 : vector<1x32xf32> to vector<8x32xf32>
      %172 = arith.mulf %169, %171 : vector<8x32xf32>
      %cst_88 = arith.constant dense<0.000000e+00> : vector<8xf32>
      %173 = vector.multi_reduction <add>, %172, %cst_88 [1] : vector<8x32xf32> to vector<8xf32>
      %174 = vector.shape_cast %173 : vector<8xf32> to vector<8x1xf32>
      %c0_89 = arith.constant 0 : index
      %c0_90 = arith.constant 0 : index
      %175 = vector.load %arg22[%c0_89, %c0_90] : memref<8x32xf32, #tpu.memory_space<vmem>>, vector<8x32xf32>
      %176 = vector.broadcast %174 : vector<8x1xf32> to vector<8x32xf32>
      %177 = arith.mulf %176, %175 : vector<8x32xf32>
      %cst_91 = arith.constant dense<0.000000e+00> : vector<32xf32>
      %178 = vector.multi_reduction <add>, %177, %cst_91 [0] : vector<8x32xf32> to vector<32xf32>
      %179 = vector.shape_cast %178 : vector<32xf32> to vector<1x32xf32>
      %180 = vector.shape_cast %179 : vector<1x32xf32> to vector<1x1x32xf32>
      %c0_92 = arith.constant 0 : index
      %c0_93 = arith.constant 0 : index
      %c0_94 = arith.constant 0 : index
      %181 = vector.load %arg23[%c0_92, %c0_93, %c0_94] : memref<1x1x32xf32, #tpu.memory_space<vmem>>, vector<1x1x32xf32>
      tpu.vector_store %arg23[%c0_92, %c0_93, %c0_94], %180 {strides = array<i32>} : memref<1x1x32xf32, #tpu.memory_space<vmem>>, vector<1x1x32xf32>,
    } else {
    }
    return
  }
  func.func @transform_0(%arg0: i32, %arg1: i32) -> (i32, i32, i32) {
    %c0_i32 = arith.constant 0 : i32
    %c0_i32_0 = arith.constant 0 : i32
    %c0_i32_1 = arith.constant 0 : i32
    return %arg0, %c0_i32, %c0_i32_0 : i32, i32, i32
  }
  func.func @transform_1(%arg0: i32, %arg1: i32) -> (i32, i32, i32) {
    %c0_i32 = arith.constant 0 : i32
    %c0_i32_0 = arith.constant 0 : i32
    %c0_i32_1 = arith.constant 0 : i32
    return %arg1, %c0_i32, %c0_i32_0 : i32, i32, i32
  }
  func.func @transform_2(%arg0: i32, %arg1: i32) -> (i32, i32, i32) {
    %c0_i32 = arith.constant 0 : i32
    %c0_i32_0 = arith.constant 0 : i32
    %c0_i32_1 = arith.constant 0 : i32
    return %arg1, %c0_i32, %c0_i32_0 : i32, i32, i32
  }
  func.func @transform_3(%arg0: i32, %arg1: i32) -> (i32, i32, i32) {
    %c0_i32 = arith.constant 0 : i32
    %c0_i32_0 = arith.constant 0 : i32
    %c0_i32_1 = arith.constant 0 : i32
    return %arg1, %c0_i32, %c0_i32_0 : i32, i32, i32
  }
  func.func @transform_4(%arg0: i32, %arg1: i32) -> (i32, i32, i32) {
    %c0_i32 = arith.constant 0 : i32
    %c0_i32_0 = arith.constant 0 : i32
    %c0_i32_1 = arith.constant 0 : i32
    return %arg1, %c0_i32, %c0_i32_0 : i32, i32, i32
  }
  func.func @transform_5(%arg0: i32, %arg1: i32) -> (i32, i32, i32) {
    %c0_i32 = arith.constant 0 : i32
    %c0_i32_0 = arith.constant 0 : i32
    %c0_i32_1 = arith.constant 0 : i32
    return %arg1, %c0_i32, %c0_i32_0 : i32, i32, i32
  }
  func.func @transform_6(%arg0: i32, %arg1: i32) -> (i32, i32, i32) {
    %c0_i32 = arith.constant 0 : i32
    %c0_i32_0 = arith.constant 0 : i32
    %c0_i32_1 = arith.constant 0 : i32
    return %arg1, %c0_i32, %c0_i32_0 : i32, i32, i32
  }
  func.func @transform_7(%arg0: i32, %arg1: i32) -> (i32, i32, i32) {
    %c0_i32 = arith.constant 0 : i32
    %c0_i32_0 = arith.constant 0 : i32
    %c0_i32_1 = arith.constant 0 : i32
    return %arg1, %c0_i32, %c0_i32_0 : i32, i32, i32
  }
  func.func @transform_8(%arg0: i32, %arg1: i32) -> (i32, i32, i32) {
    %c0_i32 = arith.constant 0 : i32
    %c0_i32_0 = arith.constant 0 : i32
    %c0_i32_1 = arith.constant 0 : i32
    return %arg1, %c0_i32, %c0_i32_0 : i32, i32, i32
  }
  func.func @transform_9(%arg0: i32, %arg1: i32) -> (i32, i32, i32) {
    %c0_i32 = arith.constant 0 : i32
    %c0_i32_0 = arith.constant 0 : i32
    %c0_i32_1 = arith.constant 0 : i32
    return %arg1, %c0_i32, %c0_i32_0 : i32, i32, i32
  }
  func.func @transform_10(%arg0: i32, %arg1: i32) -> (i32, i32, i32) {
    %c0_i32 = arith.constant 0 : i32
    %c0_i32_0 = arith.constant 0 : i32
    %c0_i32_1 = arith.constant 0 : i32
    return %arg1, %c0_i32, %c0_i32_0 : i32, i32, i32
  }
  func.func @transform_11(%arg0: i32, %arg1: i32) -> (i32, i32, i32) {
    %c0_i32 = arith.constant 0 : i32
    %c0_i32_0 = arith.constant 0 : i32
    %c0_i32_1 = arith.constant 0 : i32
    return %arg1, %c0_i32, %c0_i32_0 : i32, i32, i32
  }
  func.func @transform_12(%arg0: i32, %arg1: i32) -> (i32, i32, i32) {
    %c0_i32 = arith.constant 0 : i32
    %c0_i32_0 = arith.constant 0 : i32
    %c0_i32_1 = arith.constant 0 : i32
    return %arg1, %c0_i32, %c0_i32_0 : i32, i32, i32
  }
  func.func @transform_13(%arg0: i32, %arg1: i32) -> (i32, i32, i32) {
    %c0_i32 = arith.constant 0 : i32
    %c0_i32_0 = arith.constant 0 : i32
    %c0_i32_1 = arith.constant 0 : i32
    return %arg1, %c0_i32, %c0_i32_0 : i32, i32, i32
  }
  func.func @transform_14(%arg0: i32, %arg1: i32) -> (i32, i32, i32) {
    %c0_i32 = arith.constant 0 : i32
    %c0_i32_0 = arith.constant 0 : i32
    %c0_i32_1 = arith.constant 0 : i32
    return %arg1, %c0_i32, %c0_i32_0 : i32, i32, i32
  }
  func.func @transform_15(%arg0: i32, %arg1: i32) -> (i32, i32, i32) {
    %c0_i32 = arith.constant 0 : i32
    %c0_i32_0 = arith.constant 0 : i32
    %c0_i32_1 = arith.constant 0 : i32
    return %arg1, %c0_i32, %c0_i32_0 : i32, i32, i32
  }
  func.func @transform_16(%arg0: i32, %arg1: i32) -> (i32, i32, i32) {
    %c0_i32 = arith.constant 0 : i32
    %c0_i32_0 = arith.constant 0 : i32
    %c0_i32_1 = arith.constant 0 : i32
    return %arg1, %c0_i32, %c0_i32_0 : i32, i32, i32
  }
  func.func @transform_17(%arg0: i32, %arg1: i32) -> (i32, i32) {
    %c0_i32 = arith.constant 0 : i32
    %c0_i32_0 = arith.constant 0 : i32
    %c0_i32_1 = arith.constant 0 : i32
    return %c0_i32, %c0_i32_0 : i32, i32
  }
  func.func @transform_18(%arg0: i32, %arg1: i32) -> (i32, i32) {
    %c0_i32 = arith.constant 0 : i32
    %c0_i32_0 = arith.constant 0 : i32
    %c0_i32_1 = arith.constant 0 : i32
    return %c0_i32, %c0_i32_0 : i32, i32
  }
  func.func @transform_19(%arg0: i32, %arg1: i32) -> (i32, i32) {
    %c0_i32 = arith.constant 0 : i32
    %c0_i32_0 = arith.constant 0 : i32
    %c0_i32_1 = arith.constant 0 : i32
    return %c0_i32, %c0_i32_0 : i32, i32
  }
  func.func @transform_20(%arg0: i32, %arg1: i32) -> (i32, i32) {
    %c0_i32 = arith.constant 0 : i32
    %c0_i32_0 = arith.constant 0 : i32
    %c0_i32_1 = arith.constant 0 : i32
    return %c0_i32, %c0_i32_0 : i32, i32
  }
  func.func @transform_21(%arg0: i32, %arg1: i32) -> (i32, i32, i32) {
    %c0_i32 = arith.constant 0 : i32
    %c0_i32_0 = arith.constant 0 : i32
    %c0_i32_1 = arith.constant 0 : i32
    return %arg0, %c0_i32, %c0_i32_0 : i32, i32, i32
  }
}

</mosaic_0001>

<llo_original>
// kernel: g_encoder_forward.1
$region0: #{g_encoder_forward.1}
  #allocation0 [shape = 'u32[]', space=smem, size = 0x4, offset = 0x4, fixed_abs, tag = 'smem constant byte address 0x4 - core index']
  #allocation1 [shape = 'u32[144,128]{1,0:T(1,128)}', space=vmem, size = 0x12000, scoped, tag = 'internal scratch']
  #allocation2 [shape = 'f32[8,32]{1,0:T(8,128)}', space=vmem, size = 0x1000, scoped, tag = 'scratch operand']
  %s0 = inlined_call_operand.vmem [shape: f32[2,8,32], index: 0, kind: input, shape index: {}]
  %s1 = inlined_call_operand.vmem [shape: f32[2,1,32], index: 1, kind: input, shape index: {}]
  %s2 = inlined_call_operand.vmem [shape: f32[2,1,32], index: 2, kind: input, shape index: {}]
  %s3 = inlined_call_operand.vmem [shape: bf16[2,32,32], index: 3, kind: input, shape index: {}]
  %s4 = inlined_call_operand.vmem [shape: f32[2,32,1], index: 4, kind: input, shape index: {}]
  %s5 = inlined_call_operand.vmem [shape: bf16[2,32,32], index: 5, kind: input, shape index: {}]
  %s6 = inlined_call_operand.vmem [shape: f32[2,32,1], index: 6, kind: input, shape index: {}]
  %s7 = inlined_call_operand.vmem [shape: bf16[2,32,32], index: 7, kind: input, shape index: {}]
  %s8 = inlined_call_operand.vmem [shape: f32[2,32,1], index: 8, kind: input, shape index: {}]
  %s9 = inlined_call_operand.vmem [shape: bf16[2,32,32], index: 9, kind: input, shape index: {}]
  %s10 = inlined_call_operand.vmem [shape: f32[2,32,1], index: 10, kind: input, shape index: {}]
  %s11 = inlined_call_operand.vmem [shape: f32[2,1,32], index: 11, kind: input, shape index: {}]
  %s12 = inlined_call_operand.vmem [shape: f32[2,1,32], index: 12, kind: input, shape index: {}]
  %s13 = inlined_call_operand.vmem [shape: bf16[2,32,128], index: 13, kind: input, shape index: {}]
  %s14 = inlined_call_operand.vmem [shape: f32[2,1,128], index: 14, kind: input, shape index: {}]
  %s15 = inlined_call_operand.vmem [shape: bf16[2,128,32], index: 15, kind: input, shape index: {}]
  %s16 = inlined_call_operand.vmem [shape: f32[2,1,32], index: 16, kind: input, shape index: {}]
  %s17 = inlined_call_operand.vmem [shape: f32[1,32], index: 17, kind: input, shape index: {}]
  %s18 = inlined_call_operand.vmem [shape: f32[1,32], index: 18, kind: input, shape index: {}]
  %s19 = inlined_call_operand.vmem [shape: f32[1,32], index: 19, kind: input, shape index: {}]
  %s20 = inlined_call_operand.vmem [shape: f32[8,32], index: 20, kind: input, shape index: {}]
  %s21 = inlined_call_operand.hbm [shape: f32[2,1,32], index: 21, kind: output, shape index: {}]
  %s22 = sld [smem:[#allocation0]]
  $region125: #{g_encoder_forward.1} parent=0
    _
  %s24 = ssub.s32 1, %s22
  %s25 = scalar_select 0, %s24, %s22
  $region1: #{g_encoder_forward.1} parent=0
    #allocation3 [shape = 'u8[1024]{0}', space=vmem, size = 0x400, scoped, tag = 'output window, operand 0']
    #allocation4 [shape = 's32[2]{0}', space=sflag, size = 0x8, scoped, tag = 'scoped memory for g_encoder_forward.1']
    %26 = vsyncpa [#allocation4], 0
    %s27 = scalar_lea.sflag [#allocation4], 1
    %28 = vsyncpa %s27, 0
    loop: start=0, step=1, limit=6
    $region2: #{g_encoder_forward.1} parent=1 // loop_pre_header
      _
    $region3: #{g_encoder_forward.1} parent=1 // loop_header
      %s30 = sphi 0, %s34
      %p31 = scmp.ge.s32.totalorder %s30, 6
      %s37 = sphi 0, %s49
      %s38 = sphi 0, %s45
      %s39 = sphi 0, %s37
      %s40 = sphi 0, %s38
      %s41 = sphi 0, %s39
      %s42 = sphi 0, %s40
      %s52 = sphi 0, %s54
      %s55 = sphi 0, %s52
      %s56 = sphi 0, %s55
      %s72 = sphi 0, %s56
      %s78 = sphi 0, %s80
      %s81 = sphi 0, %s78
      %s82 = sphi 0, %s81
      %s98 = sphi 0, %s82
      %s104 = sphi 0, %s106
      %s107 = sphi 0, %s104
      %s108 = sphi 0, %s107
      %s124 = sphi 0, %s108
      %s130 = sphi 0, %s132
      %s133 = sphi 0, %s130
      %s134 = sphi 0, %s133
      %s150 = sphi 0, %s134
      %s156 = sphi 0, %s158
      %s159 = sphi 0, %s156
      %s160 = sphi 0, %s159
      %s176 = sphi 0, %s160
      %s182 = sphi 0, %s184
      %s185 = sphi 0, %s182
      %s186 = sphi 0, %s185
      %s202 = sphi 0, %s186
      %s208 = sphi 0, %s210
      %s211 = sphi 0, %s208
      %s212 = sphi 0, %s211
      %s228 = sphi 0, %s212
      %s234 = sphi 0, %s236
      %s237 = sphi 0, %s234
      %s238 = sphi 0, %s237
      %s254 = sphi 0, %s238
      %s260 = sphi 0, %s262
      %s263 = sphi 0, %s260
      %s264 = sphi 0, %s263
      %s280 = sphi 0, %s264
      %s286 = sphi 0, %s288
      %s289 = sphi 0, %s286
      %s290 = sphi 0, %s289
      %s306 = sphi 0, %s290
      %s312 = sphi 0, %s314
      %s315 = sphi 0, %s312
      %s316 = sphi 0, %s315
      %s332 = sphi 0, %s316
      %s338 = sphi 0, %s340
      %s341 = sphi 0, %s338
      %s342 = sphi 0, %s341
      %s358 = sphi 0, %s342
      %s364 = sphi 0, %s366
      %s367 = sphi 0, %s364
      %s368 = sphi 0, %s367
      %s384 = sphi 0, %s368
      %s390 = sphi 0, %s392
      %s393 = sphi 0, %s390
      %s394 = sphi 0, %s393
      %s410 = sphi 0, %s394
      %s416 = sphi 0, %s418
      %s419 = sphi 0, %s416
      %s420 = sphi 0, %s419
      %s436 = sphi 0, %s420
      %s442 = sphi 0, %s444
      %s445 = sphi 0, %s442
      %s446 = sphi 0, %s445
      %s462 = sphi 0, %s446
      %s468 = sphi 0, %s470
      %s471 = sphi 0, %s468
      %s472 = sphi 0, %s471
      %s488 = sphi 0, %s472
      %s492 = sphi 0, %s492
      %s494 = sphi 0, %s492
      %s495 = sphi 0, %s494
      %s509 = sphi 0, %s495
      %s513 = sphi 0, %s513
      %s515 = sphi 0, %s513
      %s516 = sphi 0, %s515
      %s530 = sphi 0, %s516
      %s534 = sphi 0, %s534
      %s536 = sphi 0, %s534
      %s537 = sphi 0, %s536
      %s551 = sphi 0, %s537
      %s555 = sphi 0, %s555
      %s557 = sphi 0, %s555
      %s558 = sphi 0, %s557
      %s572 = sphi 0, %s558
      %s578 = sphi 0, %s580
      %s581 = sphi 0, %s578
      %s582 = sphi 0, %s581
      %s598 = sphi 0, %s582
    $region4: #{g_encoder_forward.1} parent=1 // loop_header_branch
      %33 = sbr.rel (%p31) target = $region8
    $region5: #{g_encoder_forward.1} parent=1 // loop_body
      %s35 = ssub.s32 %s30, 1
      %s36 = ssub.s32 %s30, 2
      %s43 = sadd.s32 1, %s38
      %p44 = scmp.ge.s32.totalorder %s43, 2
      %s45 = scalar_select %p44, 0, %s43
      %s46 = sadd.s32 1, %s37
      %s47 = scalar_select %p44, %s46, %s37
      %p48 = scmp.ge.s32.totalorder %s47, 2
      %s49 = scalar_select %p48, 0, %s47
      %s50 = ssub.s32 %s37, %s49
      %p51 = scmp.eq.s32.totalorder %s50, 0
      %s53 = sadd.s32 %s52, 1
      %s54 = scalar_select %p51, %s52, %s53
      %p57 = pneg %p51
      %p58 = scmp.eq.s32.totalorder %s30, 3
      %p59 = por %p57, %p58
      %p60 = scmp.ne.s32.totalorder %s52, %s55
      %p61 = scmp.eq.s32.totalorder %s30, 0
      %p62 = por %p60, %p61
      %p63 = scmp.ne.s32.totalorder %s52, %s55
      %p64 = scmp.eq.s32.totalorder %s35, 3
      %p65 = por %p63, %p64
      %p66 = scmp.ne.s32.totalorder %s55, %s56
      %p67 = scmp.eq.s32.totalorder %s35, 0
      %p68 = por %p66, %p67
      %p69 = scmp.ne.s32.totalorder %s55, %s56
      %p70 = scmp.eq.s32.totalorder %s36, 3
      %p71 = por %p69, %p70
      %p73 = scmp.ne.s32.totalorder %s56, %s72
      %p74 = scmp.eq.s32.totalorder %s36, 0
      %p75 = por %p73, %p74
      %s76 = ssub.s32 %s38, %s45
      %p77 = scmp.eq.s32.totalorder %s76, 0
      %s79 = sadd.s32 %s78, 1
      %s80 = scalar_select %p77, %s78, %s79
      %p83 = pneg %p77
      %p84 = scmp.eq.s32.totalorder %s30, 3
      %p85 = por %p83, %p84
      %p86 = scmp.ne.s32.totalorder %s78, %s81
      %p87 = scmp.eq.s32.totalorder %s30, 0
      %p88 = por %p86, %p87
      %p89 = scmp.ne.s32.totalorder %s78, %s81
      %p90 = scmp.eq.s32.totalorder %s35, 3
      %p91 = por %p89, %p90
      %p92 = scmp.ne.s32.totalorder %s81, %s82
      %p93 = scmp.eq.s32.totalorder %s35, 0
      %p94 = por %p92, %p93
      %p95 = scmp.ne.s32.totalorder %s81, %s82
      %p96 = scmp.eq.s32.totalorder %s36, 3
      %p97 = por %p95, %p96
      %p99 = scmp.ne.s32.totalorder %s82, %s98
      %p100 = scmp.eq.s32.totalorder %s36, 0
      %p101 = por %p99, %p100
      %s102 = ssub.s32 %s38, %s45
      %p103 = scmp.eq.s32.totalorder %s102, 0
      %s105 = sadd.s32 %s104, 1
      %s106 = scalar_select %p103, %s104, %s105
      %p109 = pneg %p103
      %p110 = scmp.eq.s32.totalorder %s30, 3
      %p111 = por %p109, %p110
      %p112 = scmp.ne.s32.totalorder %s104, %s107
      %p113 = scmp.eq.s32.totalorder %s30, 0
      %p114 = por %p112, %p113
      %p115 = scmp.ne.s32.totalorder %s104, %s107
      %p116 = scmp.eq.s32.totalorder %s35, 3
      %p117 = por %p115, %p116
      %p118 = scmp.ne.s32.totalorder %s107, %s108
      %p119 = scmp.eq.s32.totalorder %s35, 0
      %p120 = por %p118, %p119
      %p121 = scmp.ne.s32.totalorder %s107, %s108
      %p122 = scmp.eq.s32.totalorder %s36, 3
      %p123 = por %p121, %p122
      %p125 = scmp.ne.s32.totalorder %s108, %s124
      %p126 = scmp.eq.s32.totalorder %s36, 0
      %p127 = por %p125, %p126
      %s128 = ssub.s32 %s38, %s45
      %p129 = scmp.eq.s32.totalorder %s128, 0
      %s131 = sadd.s32 %s130, 1
      %s132 = scalar_select %p129, %s130, %s131
      %p135 = pneg %p129
      %p136 = scmp.eq.s32.totalorder %s30, 3
      %p137 = por %p135, %p136
      %p138 = scmp.ne.s32.totalorder %s130, %s133
      %p139 = scmp.eq.s32.totalorder %s30, 0
      %p140 = por %p138, %p139
      %p141 = scmp.ne.s32.totalorder %s130, %s133
      %p142 = scmp.eq.s32.totalorder %s35, 3
      %p143 = por %p141, %p142
      %p144 = scmp.ne.s32.totalorder %s133, %s134
      %p145 = scmp.eq.s32.totalorder %s35, 0
      %p146 = por %p144, %p145
      %p147 = scmp.ne.s32.totalorder %s133, %s134
      %p148 = scmp.eq.s32.totalorder %s36, 3
      %p149 = por %p147, %p148
      %p151 = scmp.ne.s32.totalorder %s134, %s150
      %p152 = scmp.eq.s32.totalorder %s36, 0
      %p153 = por %p151, %p152
      %s154 = ssub.s32 %s38, %s45
      %p155 = scmp.eq.s32.totalorder %s154, 0
      %s157 = sadd.s32 %s156, 1
      %s158 = scalar_select %p155, %s156, %s157
      %p161 = pneg %p155
      %p162 = scmp.eq.s32.totalorder %s30, 3
      %p163 = por %p161, %p162
      %p164 = scmp.ne.s32.totalorder %s156, %s159
      %p165 = scmp.eq.s32.totalorder %s30, 0
      %p166 = por %p164, %p165
      %p167 = scmp.ne.s32.totalorder %s156, %s159
      %p168 = scmp.eq.s32.totalorder %s35, 3
      %p169 = por %p167, %p168
      %p170 = scmp.ne.s32.totalorder %s159, %s160
      %p171 = scmp.eq.s32.totalorder %s35, 0
      %p172 = por %p170, %p171
      %p173 = scmp.ne.s32.totalorder %s159, %s160
      %p174 = scmp.eq.s32.totalorder %s36, 3
      %p175 = por %p173, %p174
      %p177 = scmp.ne.s32.totalorder %s160, %s176
      %p178 = scmp.eq.s32.totalorder %s36, 0
      %p179 = por %p177, %p178
      %s180 = ssub.s32 %s38, %s45
      %p181 = scmp.eq.s32.totalorder %s180, 0
      %s183 = sadd.s32 %s182, 1
      %s184 = scalar_select %p181, %s182, %s183
      %p187 = pneg %p181
      %p188 = scmp.eq.s32.totalorder %s30, 3
      %p189 = por %p187, %p188
      %p190 = scmp.ne.s32.totalorder %s182, %s185
      %p191 = scmp.eq.s32.totalorder %s30, 0
      %p192 = por %p190, %p191
      %p193 = scmp.ne.s32.totalorder %s182, %s185
      %p194 = scmp.eq.s32.totalorder %s35, 3
      %p195 = por %p193, %p194
      %p196 = scmp.ne.s32.totalorder %s185, %s186
      %p197 = scmp.eq.s32.totalorder %s35, 0
      %p198 = por %p196, %p197
      %p199 = scmp.ne.s32.totalorder %s185, %s186
      %p200 = scmp.eq.s32.totalorder %s36, 3
      %p201 = por %p199, %p200
      %p203 = scmp.ne.s32.totalorder %s186, %s202
      %p204 = scmp.eq.s32.totalorder %s36, 0
      %p205 = por %p203, %p204
      %s206 = ssub.s32 %s38, %s45
      %p207 = scmp.eq.s32.totalorder %s206, 0
      %s209 = sadd.s32 %s208, 1
      %s210 = scalar_select %p207, %s208, %s209
      %p213 = pneg %p207
      %p214 = scmp.eq.s32.totalorder %s30, 3
      %p215 = por %p213, %p214
      %p216 = scmp.ne.s32.totalorder %s208, %s211
      %p217 = scmp.eq.s32.totalorder %s30, 0
      %p218 = por %p216, %p217
      %p219 = scmp.ne.s32.totalorder %s208, %s211
      %p220 = scmp.eq.s32.totalorder %s35, 3
      %p221 = por %p219, %p220
      %p222 = scmp.ne.s32.totalorder %s211, %s212
      %p223 = scmp.eq.s32.totalorder %s35, 0
      %p224 = por %p222, %p223
      %p225 = scmp.ne.s32.totalorder %s211, %s212
      %p226 = scmp.eq.s32.totalorder %s36, 3
      %p227 = por %p225, %p226
      %p229 = scmp.ne.s32.totalorder %s212, %s228
      %p230 = scmp.eq.s32.totalorder %s36, 0
      %p231 = por %p229, %p230
      %s232 = ssub.s32 %s38, %s45
      %p233 = scmp.eq.s32.totalorder %s232, 0
      %s235 = sadd.s32 %s234, 1
      %s236 = scalar_select %p233, %s234, %s235
      %p239 = pneg %p233
      %p240 = scmp.eq.s32.totalorder %s30, 3
      %p241 = por %p239, %p240
      %p242 = scmp.ne.s32.totalorder %s234, %s237
      %p243 = scmp.eq.s32.totalorder %s30, 0
      %p244 = por %p242, %p243
      %p245 = scmp.ne.s32.totalorder %s234, %s237
      %p246 = scmp.eq.s32.totalorder %s35, 3
      %p247 = por %p245, %p246
      %p248 = scmp.ne.s32.totalorder %s237, %s238
      %p249 = scmp.eq.s32.totalorder %s35, 0
      %p250 = por %p248, %p249
      %p251 = scmp.ne.s32.totalorder %s237, %s238
      %p252 = scmp.eq.s32.totalorder %s36, 3
      %p253 = por %p251, %p252
      %p255 = scmp.ne.s32.totalorder %s238, %s254
      %p256 = scmp.eq.s32.totalorder %s36, 0
      %p257 = por %p255, %p256
      %s258 = ssub.s32 %s38, %s45
      %p259 = scmp.eq.s32.totalorder %s258, 0
      %s261 = sadd.s32 %s260, 1
      %s262 = scalar_select %p259, %s260, %s261
      %p265 = pneg %p259
      %p266 = scmp.eq.s32.totalorder %s30, 3
      %p267 = por %p265, %p266
      %p268 = scmp.ne.s32.totalorder %s260, %s263
      %p269 = scmp.eq.s32.totalorder %s30, 0
      %p270 = por %p268, %p269
      %p271 = scmp.ne.s32.totalorder %s260, %s263
      %p272 = scmp.eq.s32.totalorder %s35, 3
      %p273 = por %p271, %p272
      %p274 = scmp.ne.s32.totalorder %s263, %s264
      %p275 = scmp.eq.s32.totalorder %s35, 0
      %p276 = por %p274, %p275
      %p277 = scmp.ne.s32.totalorder %s263, %s264
      %p278 = scmp.eq.s32.totalorder %s36, 3
      %p279 = por %p277, %p278
      %p281 = scmp.ne.s32.totalorder %s264, %s280
      %p282 = scmp.eq.s32.totalorder %s36, 0
      %p283 = por %p281, %p282
      %s284 = ssub.s32 %s38, %s45
      %p285 = scmp.eq.s32.totalorder %s284, 0
      %s287 = sadd.s32 %s286, 1
      %s288 = scalar_select %p285, %s286, %s287
      %p291 = pneg %p285
      %p292 = scmp.eq.s32.totalorder %s30, 3
      %p293 = por %p291, %p292
      %p294 = scmp.ne.s32.totalorder %s286, %s289
      %p295 = scmp.eq.s32.totalorder %s30, 0
      %p296 = por %p294, %p295
      %p297 = scmp.ne.s32.totalorder %s286, %s289
      %p298 = scmp.eq.s32.totalorder %s35, 3
      %p299 = por %p297, %p298
      %p300 = scmp.ne.s32.totalorder %s289, %s290
      %p301 = scmp.eq.s32.totalorder %s35, 0
      %p302 = por %p300, %p301
      %p303 = scmp.ne.s32.totalorder %s289, %s290
      %p304 = scmp.eq.s32.totalorder %s36, 3
      %p305 = por %p303, %p304
      %p307 = scmp.ne.s32.totalorder %s290, %s306
      %p308 = scmp.eq.s32.totalorder %s36, 0
      %p309 = por %p307, %p308
      %s310 = ssub.s32 %s38, %s45
      %p311 = scmp.eq.s32.totalorder %s310, 0
      %s313 = sadd.s32 %s312, 1
      %s314 = scalar_select %p311, %s312, %s313
      %p317 = pneg %p311
      %p318 = scmp.eq.s32.totalorder %s30, 3
      %p319 = por %p317, %p318
      %p320 = scmp.ne.s32.totalorder %s312, %s315
      %p321 = scmp.eq.s32.totalorder %s30, 0
      %p322 = por %p320, %p321
      %p323 = scmp.ne.s32.totalorder %s312, %s315
      %p324 = scmp.eq.s32.totalorder %s35, 3
      %p325 = por %p323, %p324
      %p326 = scmp.ne.s32.totalorder %s315, %s316
      %p327 = scmp.eq.s32.totalorder %s35, 0
      %p328 = por %p326, %p327
      %p329 = scmp.ne.s32.totalorder %s315, %s316
      %p330 = scmp.eq.s32.totalorder %s36, 3
      %p331 = por %p329, %p330
      %p333 = scmp.ne.s32.totalorder %s316, %s332
      %p334 = scmp.eq.s32.totalorder %s36, 0
      %p335 = por %p333, %p334
      %s336 = ssub.s32 %s38, %s45
      %p337 = scmp.eq.s32.totalorder %s336, 0
      %s339 = sadd.s32 %s338, 1
      %s340 = scalar_select %p337, %s338, %s339
      %p343 = pneg %p337
      %p344 = scmp.eq.s32.totalorder %s30, 3
      %p345 = por %p343, %p344
      %p346 = scmp.ne.s32.totalorder %s338, %s341
      %p347 = scmp.eq.s32.totalorder %s30, 0
      %p348 = por %p346, %p347
      %p349 = scmp.ne.s32.totalorder %s338, %s341
      %p350 = scmp.eq.s32.totalorder %s35, 3
      %p351 = por %p349, %p350
      %p352 = scmp.ne.s32.totalorder %s341, %s342
      %p353 = scmp.eq.s32.totalorder %s35, 0
      %p354 = por %p352, %p353
      %p355 = scmp.ne.s32.totalorder %s341, %s342
      %p356 = scmp.eq.s32.totalorder %s36, 3
      %p357 = por %p355, %p356
      %p359 = scmp.ne.s32.totalorder %s342, %s358
      %p360 = scmp.eq.s32.totalorder %s36, 0
      %p361 = por %p359, %p360
      %s362 = ssub.s32 %s38, %s45
      %p363 = scmp.eq.s32.totalorder %s362, 0
      %s365 = sadd.s32 %s364, 1
      %s366 = scalar_select %p363, %s364, %s365
      %p369 = pneg %p363
      %p370 = scmp.eq.s32.totalorder %s30, 3
      %p371 = por %p369, %p370
      %p372 = scmp.ne.s32.totalorder %s364, %s367
      %p373 = scmp.eq.s32.totalorder %s30, 0
      %p374 = por %p372, %p373
      %p375 = scmp.ne.s32.totalorder %s364, %s367
      %p376 = scmp.eq.s32.totalorder %s35, 3
      %p377 = por %p375, %p376
      %p378 = scmp.ne.s32.totalorder %s367, %s368
      %p379 = scmp.eq.s32.totalorder %s35, 0
      %p380 = por %p378, %p379
      %p381 = scmp.ne.s32.totalorder %s367, %s368
      %p382 = scmp.eq.s32.totalorder %s36, 3
      %p383 = por %p381, %p382
      %p385 = scmp.ne.s32.totalorder %s368, %s384
      %p386 = scmp.eq.s32.totalorder %s36, 0
      %p387 = por %p385, %p386
      %s388 = ssub.s32 %s38, %s45
      %p389 = scmp.eq.s32.totalorder %s388, 0
      %s391 = sadd.s32 %s390, 1
      %s392 = scalar_select %p389, %s390, %s391
      %p395 = pneg %p389
      %p396 = scmp.eq.s32.totalorder %s30, 3
      %p397 = por %p395, %p396
      %p398 = scmp.ne.s32.totalorder %s390, %s393
      %p399 = scmp.eq.s32.totalorder %s30, 0
      %p400 = por %p398, %p399
      %p401 = scmp.ne.s32.totalorder %s390, %s393
      %p402 = scmp.eq.s32.totalorder %s35, 3
      %p403 = por %p401, %p402
      %p404 = scmp.ne.s32.totalorder %s393, %s394
      %p405 = scmp.eq.s32.totalorder %s35, 0
      %p406 = por %p404, %p405
      %p407 = scmp.ne.s32.totalorder %s393, %s394
      %p408 = scmp.eq.s32.totalorder %s36, 3
      %p409 = por %p407, %p408
      %p411 = scmp.ne.s32.totalorder %s394, %s410
      %p412 = scmp.eq.s32.totalorder %s36, 0
      %p413 = por %p411, %p412
      %s414 = ssub.s32 %s38, %s45
      %p415 = scmp.eq.s32.totalorder %s414, 0
      %s417 = sadd.s32 %s416, 1
      %s418 = scalar_select %p415, %s416, %s417
      %p421 = pneg %p415
      %p422 = scmp.eq.s32.totalorder %s30, 3
      %p423 = por %p421, %p422
      %p424 = scmp.ne.s32.totalorder %s416, %s419
      %p425 = scmp.eq.s32.totalorder %s30, 0
      %p426 = por %p424, %p425
      %p427 = scmp.ne.s32.totalorder %s416, %s419
      %p428 = scmp.eq.s32.totalorder %s35, 3
      %p429 = por %p427, %p428
      %p430 = scmp.ne.s32.totalorder %s419, %s420
      %p431 = scmp.eq.s32.totalorder %s35, 0
      %p432 = por %p430, %p431
      %p433 = scmp.ne.s32.totalorder %s419, %s420
      %p434 = scmp.eq.s32.totalorder %s36, 3
      %p435 = por %p433, %p434
      %p437 = scmp.ne.s32.totalorder %s420, %s436
      %p438 = scmp.eq.s32.totalorder %s36, 0
      %p439 = por %p437, %p438
      %s440 = ssub.s32 %s38, %s45
      %p441 = scmp.eq.s32.totalorder %s440, 0
      %s443 = sadd.s32 %s442, 1
      %s444 = scalar_select %p441, %s442, %s443
      %p447 = pneg %p441
      %p448 = scmp.eq.s32.totalorder %s30, 3
      %p449 = por %p447, %p448
      %p450 = scmp.ne.s32.totalorder %s442, %s445
      %p451 = scmp.eq.s32.totalorder %s30, 0
      %p452 = por %p450, %p451
      %p453 = scmp.ne.s32.totalorder %s442, %s445
      %p454 = scmp.eq.s32.totalorder %s35, 3
      %p455 = por %p453, %p454
      %p456 = scmp.ne.s32.totalorder %s445, %s446
      %p457 = scmp.eq.s32.totalorder %s35, 0
      %p458 = por %p456, %p457
      %p459 = scmp.ne.s32.totalorder %s445, %s446
      %p460 = scmp.eq.s32.totalorder %s36, 3
      %p461 = por %p459, %p460
      %p463 = scmp.ne.s32.totalorder %s446, %s462
      %p464 = scmp.eq.s32.totalorder %s36, 0
      %p465 = por %p463, %p464
      %s466 = ssub.s32 %s38, %s45
      %p467 = scmp.eq.s32.totalorder %s466, 0
      %s469 = sadd.s32 %s468, 1
      %s470 = scalar_select %p467, %s468, %s469
      %p473 = pneg %p467
      %p474 = scmp.eq.s32.totalorder %s30, 3
      %p475 = por %p473, %p474
      %p476 = scmp.ne.s32.totalorder %s468, %s471
      %p477 = scmp.eq.s32.totalorder %s30, 0
      %p478 = por %p476, %p477
      %p479 = scmp.ne.s32.totalorder %s468, %s471
      %p480 = scmp.eq.s32.totalorder %s35, 3
      %p481 = por %p479, %p480
      %p482 = scmp.ne.s32.totalorder %s471, %s472
      %p483 = scmp.eq.s32.totalorder %s35, 0
      %p484 = por %p482, %p483
      %p485 = scmp.ne.s32.totalorder %s471, %s472
      %p486 = scmp.eq.s32.totalorder %s36, 3
      %p487 = por %p485, %p486
      %p489 = scmp.ne.s32.totalorder %s472, %s488
      %p490 = scmp.eq.s32.totalorder %s36, 0
      %p491 = por %p489, %p490
      %s493 = sadd.s32 %s492, 1
      %p496 = scmp.eq.s32.totalorder %s30, 3
      %p497 = scmp.ne.s32.totalorder %s492, %s494
      %p498 = scmp.eq.s32.totalorder %s30, 0
      %p499 = por %p497, %p498
      %p500 = scmp.ne.s32.totalorder %s492, %s494
      %p501 = scmp.eq.s32.totalorder %s35, 3
      %p502 = por %p500, %p501
      %p503 = scmp.ne.s32.totalorder %s494, %s495
      %p504 = scmp.eq.s32.totalorder %s35, 0
      %p505 = por %p503, %p504
      %p506 = scmp.ne.s32.totalorder %s494, %s495
      %p507 = scmp.eq.s32.totalorder %s36, 3
      %p508 = por %p506, %p507
      %p510 = scmp.ne.s32.totalorder %s495, %s509
      %p511 = scmp.eq.s32.totalorder %s36, 0
      %p512 = por %p510, %p511
      %s514 = sadd.s32 %s513, 1
      %p517 = scmp.eq.s32.totalorder %s30, 3
      %p518 = scmp.ne.s32.totalorder %s513, %s515
      %p519 = scmp.eq.s32.totalorder %s30, 0
      %p520 = por %p518, %p519
      %p521 = scmp.ne.s32.totalorder %s513, %s515
      %p522 = scmp.eq.s32.totalorder %s35, 3
      %p523 = por %p521, %p522
      %p524 = scmp.ne.s32.totalorder %s515, %s516
      %p525 = scmp.eq.s32.totalorder %s35, 0
      %p526 = por %p524, %p525
      %p527 = scmp.ne.s32.totalorder %s515, %s516
      %p528 = scmp.eq.s32.totalorder %s36, 3
      %p529 = por %p527, %p528
      %p531 = scmp.ne.s32.totalorder %s516, %s530
      %p532 = scmp.eq.s32.totalorder %s36, 0
      %p533 = por %p531, %p532
      %s535 = sadd.s32 %s534, 1
      %p538 = scmp.eq.s32.totalorder %s30, 3
      %p539 = scmp.ne.s32.totalorder %s534, %s536
      %p540 = scmp.eq.s32.totalorder %s30, 0
      %p541 = por %p539, %p540
      %p542 = scmp.ne.s32.totalorder %s534, %s536
      %p543 = scmp.eq.s32.totalorder %s35, 3
      %p544 = por %p542, %p543
      %p545 = scmp.ne.s32.totalorder %s536, %s537
      %p546 = scmp.eq.s32.totalorder %s35, 0
      %p547 = por %p545, %p546
      %p548 = scmp.ne.s32.totalorder %s536, %s537
      %p549 = scmp.eq.s32.totalorder %s36, 3
      %p550 = por %p548, %p549
      %p552 = scmp.ne.s32.totalorder %s537, %s551
      %p553 = scmp.eq.s32.totalorder %s36, 0
      %p554 = por %p552, %p553
      %s556 = sadd.s32 %s555, 1
      %p559 = scmp.eq.s32.totalorder %s30, 3
      %p560 = scmp.ne.s32.totalorder %s555, %s557
      %p561 = scmp.eq.s32.totalorder %s30, 0
      %p562 = por %p560, %p561
      %p563 = scmp.ne.s32.totalorder %s555, %s557
      %p564 = scmp.eq.s32.totalorder %s35, 3
      %p565 = por %p563, %p564
      %p566 = scmp.ne.s32.totalorder %s557, %s558
      %p567 = scmp.eq.s32.totalorder %s35, 0
      %p568 = por %p566, %p567
      %p569 = scmp.ne.s32.totalorder %s557, %s558
      %p570 = scmp.eq.s32.totalorder %s36, 3
      %p571 = por %p569, %p570
      %p573 = scmp.ne.s32.totalorder %s558, %s572
      %p574 = scmp.eq.s32.totalorder %s36, 0
      %p575 = por %p573, %p574
      %s576 = ssub.s32 %s37, %s49
      %p577 = scmp.eq.s32.totalorder %s576, 0
      %s579 = sadd.s32 %s578, 1
      %s580 = scalar_select %p577, %s578, %s579
      %p583 = pneg %p577
      %p584 = scmp.eq.s32.totalorder %s30, 3
      %p585 = por %p583, %p584
      %p586 = scmp.ne.s32.totalorder %s578, %s581
      %p587 = scmp.eq.s32.totalorder %s30, 0
      %p588 = por %p586, %p587
      %p589 = scmp.ne.s32.totalorder %s578, %s581
      %p590 = scmp.eq.s32.totalorder %s35, 3
      %p591 = por %p589, %p590
      %p592 = scmp.ne.s32.totalorder %s581, %s582
      %p593 = scmp.eq.s32.totalorder %s35, 0
      %p594 = por %p592, %p593
      %p595 = scmp.ne.s32.totalorder %s581, %s582
      %p596 = scmp.eq.s32.totalorder %s36, 3
      %p597 = por %p595, %p596
      %p599 = scmp.ne.s32.totalorder %s582, %s598
      %p600 = scmp.eq.s32.totalorder %s36, 0
      %p601 = por %p599, %p600
      %p602 = scmp.le.s32.totalorder 1, %s30
      %p603 = scmp.lt.s32.totalorder %s30, 5
      %p604 = pnand %p602, %p603
      %p605 = pneg %p604
      // Predicated region
      $region9: #{g_encoder_forward.1} parent=5 // pred_check
        _
      $region10: #{g_encoder_forward.1} parent=5 // pred_check_branch
        %607 = sbr.rel (%p604) target = $region12
      $region11: #{g_encoder_forward.1} parent=5 // pred_region
        %s608 = ssub.s32 %s30, 1
        // Predicated region
        $region13: #{g_encoder_forward.1} parent=11 // pred_check
          %p609 = pneg %p505
        $region14: #{g_encoder_forward.1} parent=11 // pred_check_branch
          %611 = sbr.rel (%p609) target = $region16
        $region15: #{g_encoder_forward.1} parent=11 // pred_region
          _
        $region16: #{g_encoder_forward.1} parent=11 // pred_fallthru
          _
        // Predicated region
        $region17: #{g_encoder_forward.1} parent=11 // pred_check
          %p612 = pneg %p526
        $region18: #{g_encoder_forward.1} parent=11 // pred_check_branch
          %614 = sbr.rel (%p612) target = $region20
        $region19: #{g_encoder_forward.1} parent=11 // pred_region
          _
        $region20: #{g_encoder_forward.1} parent=11 // pred_fallthru
          _
        // Predicated region
        $region21: #{g_encoder_forward.1} parent=11 // pred_check
          %p615 = pneg %p547
        $region22: #{g_encoder_forward.1} parent=11 // pred_check_branch
          %617 = sbr.rel (%p615) target = $region24
        $region23: #{g_encoder_forward.1} parent=11 // pred_region
          _
        $region24: #{g_encoder_forward.1} parent=11 // pred_fallthru
          _
        // Predicated region
        $region25: #{g_encoder_forward.1} parent=11 // pred_check
          %p618 = pneg %p568
        $region26: #{g_encoder_forward.1} parent=11 // pred_check_branch
          %620 = sbr.rel (%p618) target = $region28
        $region27: #{g_encoder_forward.1} parent=11 // pred_region
          _
        $region28: #{g_encoder_forward.1} parent=11 // pred_fallthru
          _
      $region12: #{g_encoder_forward.1} parent=5 // pred_fallthru
        _
      %p621 = scmp.lt.s32.totalorder %s30, 4
      // Predicated region
      $region29: #{g_encoder_forward.1} parent=5 // pred_check
        %p622 = pneg %p621
      $region30: #{g_encoder_forward.1} parent=5 // pred_check_branch
        %624 = sbr.rel (%p622) target = $region32
      $region31: #{g_encoder_forward.1} parent=5 // pred_region
        // Predicated region
        $region33: #{g_encoder_forward.1} parent=31 // pred_check
          %p625 = pneg %p62
        $region34: #{g_encoder_forward.1} parent=31 // pred_check_branch
          %627 = sbr.rel (%p625) target = $region36
        $region35: #{g_encoder_forward.1} parent=31 // pred_region
          %p628 = scmp.lt.s32.totalorder %s37, 1
          %s629 = scalar_select %p628, %s37, 1
          %s630 = smul.addr %s629, 8
          %s631 = scalar_lea.vmem %s0, %s630
        $region36: #{g_encoder_forward.1} parent=31 // pred_fallthru
          _
        // Predicated region
        $region37: #{g_encoder_forward.1} parent=31 // pred_check
          %p632 = pneg %p88
        $region38: #{g_encoder_forward.1} parent=31 // pred_check_branch
          %634 = sbr.rel (%p632) target = $region40
        $region39: #{g_encoder_forward.1} parent=31 // pred_region
          %p635 = scmp.lt.s32.totalorder %s38, 1
          %s636 = scalar_select %p635, %s38, 1
          %s637 = scalar_lea.vmem %s1, %s636
        $region40: #{g_encoder_forward.1} parent=31 // pred_fallthru
          _
        // Predicated region
        $region41: #{g_encoder_forward.1} parent=31 // pred_check
          %p638 = pneg %p114
        $region42: #{g_encoder_forward.1} parent=31 // pred_check_branch
          %640 = sbr.rel (%p638) target = $region44
        $region43: #{g_encoder_forward.1} parent=31 // pred_region
          %p641 = scmp.lt.s32.totalorder %s38, 1
          %s642 = scalar_select %p641, %s38, 1
          %s643 = scalar_lea.vmem %s2, %s642
        $region44: #{g_encoder_forward.1} parent=31 // pred_fallthru
          _
        // Predicated region
        $region45: #{g_encoder_forward.1} parent=31 // pred_check
          %p644 = pneg %p140
        $region46: #{g_encoder_forward.1} parent=31 // pred_check_branch
          %646 = sbr.rel (%p644) target = $region48
        $region47: #{g_encoder_forward.1} parent=31 // pred_region
          %p647 = scmp.lt.s32.totalorder %s38, 1
          %s648 = scalar_select %p647, %s38, 1
          %s649 = smul.addr %s648, 4
          %s650 = smul.addr %s649, 4
          %s651 = scalar_lea.vmem %s3, %s650
        $region48: #{g_encoder_forward.1} parent=31 // pred_fallthru
          _
        // Predicated region
        $region49: #{g_encoder_forward.1} parent=31 // pred_check
          %p652 = pneg %p166
        $region50: #{g_encoder_forward.1} parent=31 // pred_check_branch
          %654 = sbr.rel (%p652) target = $region52
        $region51: #{g_encoder_forward.1} parent=31 // pred_region
          %p655 = scmp.lt.s32.totalorder %s38, 1
          %s656 = scalar_select %p655, %s38, 1
          %s657 = smul.addr %s656, 4
          %s658 = smul.addr %s657, 8
          %s659 = scalar_lea.vmem %s4, %s658
        $region52: #{g_encoder_forward.1} parent=31 // pred_fallthru
          _
        // Predicated region
        $region53: #{g_encoder_forward.1} parent=31 // pred_check
          %p660 = pneg %p192
        $region54: #{g_encoder_forward.1} parent=31 // pred_check_branch
          %662 = sbr.rel (%p660) target = $region56
        $region55: #{g_encoder_forward.1} parent=31 // pred_region
          %p663 = scmp.lt.s32.totalorder %s38, 1
          %s664 = scalar_select %p663, %s38, 1
          %s665 = smul.addr %s664, 4
          %s666 = smul.addr %s665, 4
          %s667 = scalar_lea.vmem %s5, %s666
        $region56: #{g_encoder_forward.1} parent=31 // pred_fallthru
          _
        // Predicated region
        $region57: #{g_encoder_forward.1} parent=31 // pred_check
          %p668 = pneg %p218
        $region58: #{g_encoder_forward.1} parent=31 // pred_check_branch
          %670 = sbr.rel (%p668) target = $region60
        $region59: #{g_encoder_forward.1} parent=31 // pred_region
          %p671 = scmp.lt.s32.totalorder %s38, 1
          %s672 = scalar_select %p671, %s38, 1
          %s673 = smul.addr %s672, 4
          %s674 = smul.addr %s673, 8
          %s675 = scalar_lea.vmem %s6, %s674
        $region60: #{g_encoder_forward.1} parent=31 // pred_fallthru
          _
        // Predicated region
        $region61: #{g_encoder_forward.1} parent=31 // pred_check
          %p676 = pneg %p244
        $region62: #{g_encoder_forward.1} parent=31 // pred_check_branch
          %678 = sbr.rel (%p676) target = $region64
        $region63: #{g_encoder_forward.1} parent=31 // pred_region
          %p679 = scmp.lt.s32.totalorder %s38, 1
          %s680 = scalar_select %p679, %s38, 1
          %s681 = smul.addr %s680, 4
          %s682 = smul.addr %s681, 4
          %s683 = scalar_lea.vmem %s7, %s682
        $region64: #{g_encoder_forward.1} parent=31 // pred_fallthru
          _
        // Predicated region
        $region65: #{g_encoder_forward.1} parent=31 // pred_check
          %p684 = pneg %p270
        $region66: #{g_encoder_forward.1} parent=31 // pred_check_branch
          %686 = sbr.rel (%p684) target = $region68
        $region67: #{g_encoder_forward.1} parent=31 // pred_region
          %p687 = scmp.lt.s32.totalorder %s38, 1
          %s688 = scalar_select %p687, %s38, 1
          %s689 = smul.addr %s688, 4
          %s690 = smul.addr %s689, 8
          %s691 = scalar_lea.vmem %s8, %s690
        $region68: #{g_encoder_forward.1} parent=31 // pred_fallthru
          _
        // Predicated region
        $region69: #{g_encoder_forward.1} parent=31 // pred_check
          %p692 = pneg %p296
        $region70: #{g_encoder_forward.1} parent=31 // pred_check_branch
          %694 = sbr.rel (%p692) target = $region72
        $region71: #{g_encoder_forward.1} parent=31 // pred_region
          %p695 = scmp.lt.s32.totalorder %s38, 1
          %s696 = scalar_select %p695, %s38, 1
          %s697 = smul.addr %s696, 4
          %s698 = smul.addr %s697, 4
          %s699 = scalar_lea.vmem %s9, %s698
        $region72: #{g_encoder_forward.1} parent=31 // pred_fallthru
          _
        // Predicated region
        $region73: #{g_encoder_forward.1} parent=31 // pred_check
          %p700 = pneg %p322
        $region74: #{g_encoder_forward.1} parent=31 // pred_check_branch
          %702 = sbr.rel (%p700) target = $region76
        $region75: #{g_encoder_forward.1} parent=31 // pred_region
          %p703 = scmp.lt.s32.totalorder %s38, 1
          %s704 = scalar_select %p703, %s38, 1
          %s705 = smul.addr %s704, 4
          %s706 = smul.addr %s705, 8
          %s707 = scalar_lea.vmem %s10, %s706
        $region76: #{g_encoder_forward.1} parent=31 // pred_fallthru
          _
        // Predicated region
        $region77: #{g_encoder_forward.1} parent=31 // pred_check
          %p708 = pneg %p348
        $region78: #{g_encoder_forward.1} parent=31 // pred_check_branch
          %710 = sbr.rel (%p708) target = $region80
        $region79: #{g_encoder_forward.1} parent=31 // pred_region
          %p711 = scmp.lt.s32.totalorder %s38, 1
          %s712 = scalar_select %p711, %s38, 1
          %s713 = scalar_lea.vmem %s11, %s712
        $region80: #{g_encoder_forward.1} parent=31 // pred_fallthru
          _
        // Predicated region
        $region81: #{g_encoder_forward.1} parent=31 // pred_check
          %p714 = pneg %p374
        $region82: #{g_encoder_forward.1} parent=31 // pred_check_branch
          %716 = sbr.rel (%p714) target = $region84
        $region83: #{g_encoder_forward.1} parent=31 // pred_region
          %p717 = scmp.lt.s32.totalorder %s38, 1
          %s718 = scalar_select %p717, %s38, 1
          %s719 = scalar_lea.vmem %s12, %s718
        $region84: #{g_encoder_forward.1} parent=31 // pred_fallthru
          _
        // Predicated region
        $region85: #{g_encoder_forward.1} parent=31 // pred_check
          %p720 = pneg %p400
        $region86: #{g_encoder_forward.1} parent=31 // pred_check_branch
          %722 = sbr.rel (%p720) target = $region88
        $region87: #{g_encoder_forward.1} parent=31 // pred_region
          %p723 = scmp.lt.s32.totalorder %s38, 1
          %s724 = scalar_select %p723, %s38, 1
          %s725 = smul.addr %s724, 4
          %s726 = smul.addr %s725, 4
          %s727 = scalar_lea.vmem %s13, %s726
        $region88: #{g_encoder_forward.1} parent=31 // pred_fallthru
          _
        // Predicated region
        $region89: #{g_encoder_forward.1} parent=31 // pred_check
          %p728 = pneg %p426
        $region90: #{g_encoder_forward.1} parent=31 // pred_check_branch
          %730 = sbr.rel (%p728) target = $region92
        $region91: #{g_encoder_forward.1} parent=31 // pred_region
          %p731 = scmp.lt.s32.totalorder %s38, 1
          %s732 = scalar_select %p731, %s38, 1
          %s733 = scalar_lea.vmem %s14, %s732
        $region92: #{g_encoder_forward.1} parent=31 // pred_fallthru
          _
        // Predicated region
        $region93: #{g_encoder_forward.1} parent=31 // pred_check
          %p734 = pneg %p452
        $region94: #{g_encoder_forward.1} parent=31 // pred_check_branch
          %736 = sbr.rel (%p734) target = $region96
        $region95: #{g_encoder_forward.1} parent=31 // pred_region
          %p737 = scmp.lt.s32.totalorder %s38, 1
          %s738 = scalar_select %p737, %s38, 1
          %s739 = smul.addr %s738, 16
          %s740 = smul.addr %s739, 4
          %s741 = scalar_lea.vmem %s15, %s740
        $region96: #{g_encoder_forward.1} parent=31 // pred_fallthru
          _
        // Predicated region
        $region97: #{g_encoder_forward.1} parent=31 // pred_check
          %p742 = pneg %p478
        $region98: #{g_encoder_forward.1} parent=31 // pred_check_branch
          %744 = sbr.rel (%p742) target = $region100
        $region99: #{g_encoder_forward.1} parent=31 // pred_region
          %p745 = scmp.lt.s32.totalorder %s38, 1
          %s746 = scalar_select %p745, %s38, 1
          %s747 = scalar_lea.vmem %s16, %s746
        $region100: #{g_encoder_forward.1} parent=31 // pred_fallthru
          _
      $region32: #{g_encoder_forward.1} parent=5 // pred_fallthru
        _
      %p748 = scmp.le.s32.totalorder 1, %s30
      %p749 = scmp.lt.s32.totalorder %s30, 5
      %p750 = pnand %p748, %p749
      %p751 = pneg %p750
      // Predicated region
      $region101: #{g_encoder_forward.1} parent=5 // pred_check
        _
      $region102: #{g_encoder_forward.1} parent=5 // pred_check_branch
        %753 = sbr.rel (%p750) target = $region104
      $region103: #{g_encoder_forward.1} parent=5 // pred_region
        %s754 = ssub.s32 %s30, 1
        %p755 = scmp.lt.s32.totalorder %s39, 1
        %s756 = scalar_select %p755, %s39, 1
        %s757 = smul.addr %s756, 8
        %s758 = scalar_lea.vmem %s0, %s757
        %p759 = pneg %p68
        %p760 = pneg %p65
        %p761 = scmp.lt.s32.totalorder %s40, 1
        %s762 = scalar_select %p761, %s40, 1
        %s763 = scalar_lea.vmem %s1, %s762
        %p764 = pneg %p94
        %p765 = pneg %p91
        %p766 = scmp.lt.s32.totalorder %s40, 1
        %s767 = scalar_select %p766, %s40, 1
        %s768 = scalar_lea.vmem %s2, %s767
        %p769 = pneg %p120
        %p770 = pneg %p117
        %p771 = scmp.lt.s32.totalorder %s40, 1
        %s772 = scalar_select %p771, %s40, 1
        %s773 = smul.addr %s772, 4
        %s774 = smul.addr %s773, 4
        %s775 = scalar_lea.vmem %s3, %s774
        %p776 = pneg %p146
        %p777 = pneg %p143
        %p778 = scmp.lt.s32.totalorder %s40, 1
        %s779 = scalar_select %p778, %s40, 1
        %s780 = smul.addr %s779, 4
        %s781 = smul.addr %s780, 8
        %s782 = scalar_lea.vmem %s4, %s781
        %p783 = pneg %p172
        %p784 = pneg %p169
        %p785 = scmp.lt.s32.totalorder %s40, 1
        %s786 = scalar_select %p785, %s40, 1
        %s787 = smul.addr %s786, 4
        %s788 = smul.addr %s787, 4
        %s789 = scalar_lea.vmem %s5, %s788
        %p790 = pneg %p198
        %p791 = pneg %p195
        %p792 = scmp.lt.s32.totalorder %s40, 1
        %s793 = scalar_select %p792, %s40, 1
        %s794 = smul.addr %s793, 4
        %s795 = smul.addr %s794, 8
        %s796 = scalar_lea.vmem %s6, %s795
        %p797 = pneg %p224
        %p798 = pneg %p221
        %p799 = scmp.lt.s32.totalorder %s40, 1
        %s800 = scalar_select %p799, %s40, 1
        %s801 = smul.addr %s800, 4
        %s802 = smul.addr %s801, 4
        %s803 = scalar_lea.vmem %s7, %s802
        %p804 = pneg %p250
        %p805 = pneg %p247
        %p806 = scmp.lt.s32.totalorder %s40, 1
        %s807 = scalar_select %p806, %s40, 1
        %s808 = smul.addr %s807, 4
        %s809 = smul.addr %s808, 8
        %s810 = scalar_lea.vmem %s8, %s809
        %p811 = pneg %p276
        %p812 = pneg %p273
        %p813 = scmp.lt.s32.totalorder %s40, 1
        %s814 = scalar_select %p813, %s40, 1
        %s815 = smul.addr %s814, 4
        %s816 = smul.addr %s815, 4
        %s817 = scalar_lea.vmem %s9, %s816
        %p818 = pneg %p302
        %p819 = pneg %p299
        %p820 = scmp.lt.s32.totalorder %s40, 1
        %s821 = scalar_select %p820, %s40, 1
        %s822 = smul.addr %s821, 4
        %s823 = smul.addr %s822, 8
        %s824 = scalar_lea.vmem %s10, %s823
        %p825 = pneg %p328
        %p826 = pneg %p325
        %p827 = scmp.lt.s32.totalorder %s40, 1
        %s828 = scalar_select %p827, %s40, 1
        %s829 = scalar_lea.vmem %s11, %s828
        %p830 = pneg %p354
        %p831 = pneg %p351
        %p832 = scmp.lt.s32.totalorder %s40, 1
        %s833 = scalar_select %p832, %s40, 1
        %s834 = scalar_lea.vmem %s12, %s833
        %p835 = pneg %p380
        %p836 = pneg %p377
        %p837 = scmp.lt.s32.totalorder %s40, 1
        %s838 = scalar_select %p837, %s40, 1
        %s839 = smul.addr %s838, 4
        %s840 = smul.addr %s839, 4
        %s841 = scalar_lea.vmem %s13, %s840
        %p842 = pneg %p406
        %p843 = pneg %p403
        %p844 = scmp.lt.s32.totalorder %s40, 1
        %s845 = scalar_select %p844, %s40, 1
        %s846 = scalar_lea.vmem %s14, %s845
        %p847 = pneg %p432
        %p848 = pneg %p429
        %p849 = scmp.lt.s32.totalorder %s40, 1
        %s850 = scalar_select %p849, %s40, 1
        %s851 = smul.addr %s850, 16
        %s852 = smul.addr %s851, 4
        %s853 = scalar_lea.vmem %s15, %s852
        %p854 = pneg %p458
        %p855 = pneg %p455
        %p856 = scmp.lt.s32.totalorder %s40, 1
        %s857 = scalar_select %p856, %s40, 1
        %s858 = scalar_lea.vmem %s16, %s857
        %p859 = pneg %p484
        %p860 = pneg %p481
        %p861 = pneg %p505
        %p862 = pneg %p502
        %p863 = pneg %p526
        %p864 = pneg %p523
        %p865 = pneg %p547
        %p866 = pneg %p544
        %p867 = pneg %p568
        %p868 = pneg %p565
        %p869 = pneg %p594
        %p870 = pneg %p591
        %s871 = sand.u32 %s581, 1
        %s872 = scalar_lea.sflag [#allocation4], %s871
        %s873 = sand.u32 %s581, 1
        %s874 = scalar_lea.vmem [#allocation3], %s873
        %p875 = scmp.lt.s32.totalorder %s39, 1
        %s876 = scalar_select %p875, %s39, 1
        %s877 = smul.addr %s876, 8
        %s878 = scalar_lea.vmem %s0, %s877
        %p879 = scmp.lt.s32.totalorder %s40, 1
        %s880 = scalar_select %p879, %s40, 1
        %s881 = scalar_lea.vmem %s1, %s880
        %p882 = scmp.lt.s32.totalorder %s40, 1
        %s883 = scalar_select %p882, %s40, 1
        %s884 = scalar_lea.vmem %s2, %s883
        %p885 = scmp.lt.s32.totalorder %s40, 1
        %s886 = scalar_select %p885, %s40, 1
        %s887 = smul.addr %s886, 4
        %s888 = smul.addr %s887, 4
        %s889 = scalar_lea.vmem %s3, %s888
        %p890 = scmp.lt.s32.totalorder %s40, 1
        %s891 = scalar_select %p890, %s40, 1
        %s892 = smul.addr %s891, 4
        %s893 = smul.addr %s892, 8
        %s894 = scalar_lea.vmem %s4, %s893
        %p895 = scmp.lt.s32.totalorder %s40, 1
        %s896 = scalar_select %p895, %s40, 1
        %s897 = smul.addr %s896, 4
        %s898 = smul.addr %s897, 4
        %s899 = scalar_lea.vmem %s5, %s898
        %p900 = scmp.lt.s32.totalorder %s40, 1
        %s901 = scalar_select %p900, %s40, 1
        %s902 = smul.addr %s901, 4
        %s903 = smul.addr %s902, 8
        %s904 = scalar_lea.vmem %s6, %s903
        %p905 = scmp.lt.s32.totalorder %s40, 1
        %s906 = scalar_select %p905, %s40, 1
        %s907 = smul.addr %s906, 4
        %s908 = smul.addr %s907, 4
        %s909 = scalar_lea.vmem %s7, %s908
        %p910 = scmp.lt.s32.totalorder %s40, 1
        %s911 = scalar_select %p910, %s40, 1
        %s912 = smul.addr %s911, 4
        %s913 = smul.addr %s912, 8
        %s914 = scalar_lea.vmem %s8, %s913
        %p915 = scmp.lt.s32.totalorder %s40, 1
        %s916 = scalar_select %p915, %s40, 1
        %s917 = smul.addr %s916, 4
        %s918 = smul.addr %s917, 4
        %s919 = scalar_lea.vmem %s9, %s918
        %p920 = scmp.lt.s32.totalorder %s40, 1
        %s921 = scalar_select %p920, %s40, 1
        %s922 = smul.addr %s921, 4
        %s923 = smul.addr %s922, 8
        %s924 = scalar_lea.vmem %s10, %s923
        %p925 = scmp.lt.s32.totalorder %s40, 1
        %s926 = scalar_select %p925, %s40, 1
        %s927 = scalar_lea.vmem %s11, %s926
        %p928 = scmp.lt.s32.totalorder %s40, 1
        %s929 = scalar_select %p928, %s40, 1
        %s930 = scalar_lea.vmem %s12, %s929
        %p931 = scmp.lt.s32.totalorder %s40, 1
        %s932 = scalar_select %p931, %s40, 1
        %s933 = smul.addr %s932, 4
        %s934 = smul.addr %s933, 4
        %s935 = scalar_lea.vmem %s13, %s934
        %p936 = scmp.lt.s32.totalorder %s40, 1
        %s937 = scalar_select %p936, %s40, 1
        %s938 = scalar_lea.vmem %s14, %s937
        %p939 = scmp.lt.s32.totalorder %s40, 1
        %s940 = scalar_select %p939, %s40, 1
        %s941 = smul.addr %s940, 16
        %s942 = smul.addr %s941, 4
        %s943 = scalar_lea.vmem %s15, %s942
        %p944 = scmp.lt.s32.totalorder %s40, 1
        %s945 = scalar_select %p944, %s40, 1
        %s946 = scalar_lea.vmem %s16, %s945
        %p948 = scmp.eq.s32.totalorder %s40, 0
        // Predicated region
        $region105: #{g_encoder_forward.1} parent=103 // pred_check
          %p949 = pneg %p948
        $region106: #{g_encoder_forward.1} parent=103 // pred_check_branch
          %951 = sbr.rel (%p949) target = $region108
        $region107: #{g_encoder_forward.1} parent=103 // pred_region
          %v952 = vld [vmem:[%s878] sm:$0xff]
          %vm953 = vcmask 261120
          %954 = vst.msk [vmem:[#allocation2] sm:$0xff] %vm953, %v952
        $region108: #{g_encoder_forward.1} parent=103 // pred_fallthru
          _
        %v955 = vld [vmem:[#allocation2] sm:$0xff]
        %v956 = vld [vmem:[%s881] sm:$0x1]
        %v957 = vld [vmem:[%s884] sm:$0x1]
        %vm958 = vcmask 261120
        %v959 = vsel %vm958, %v955, 0.0
        %960 = vadd.xlane.f32.xlu0 %v959
        %v961 = vpop.xlane.xlu0 %960
        %v962 = vrcp.pop 32.0
        %v963 = vmul.f32 %v961, %v962
        %v964 = vsub.f32 %v955, %v963
        %v965 = vmul.f32 %v964, %v964
        %v966 = vsel %vm958, %v965, 0.0
        %967 = vadd.xlane.f32.xlu0 %v966
        %v968 = vpop.xlane.xlu0 %967
        %v969 = vmul.f32 %v968, %v962
        %v970 = vadd.f32 %v969, 1e-05
        %v971 = vrsqrt.pop %v970
        %v972 = vmul.f32 %v964, %v971
        %v974 = vlaneseq
        %v975 = vshrl.u32 %v974, 7
        %v976 = vsub.s32 0, %v975
        %v977 = vrot.slane %v956, %v976
        %v979 = vmul.f32 %v972, %v977
        %v981 = vlaneseq
        %v982 = vshrl.u32 %v981, 7
        %v983 = vsub.s32 0, %v982
        %v984 = vrot.slane %v957, %v983
        %v986 = vadd.f32 %v979, %v984
        %987 = vxpose.xlu0.b32.start [1/16] %v986, 128
        %988 = vxpose.xlu0.b32.cont [2/16] 0.0, 128
        %989 = vxpose.xlu0.b32.cont [3/16] 0.0, 128
        %990 = vxpose.xlu0.b32.cont [4/16] 0.0, 128
        %991 = vxpose.xlu0.b32.cont [5/16] 0.0, 128
        %992 = vxpose.xlu0.b32.cont [6/16] 0.0, 128
        %993 = vxpose.xlu0.b32.cont [7/16] 0.0, 128
        %994 = vxpose.xlu0.b32.cont [8/16] 0.0, 128
        %995 = vxpose.xlu0.b32.cont [9/16] 0.0, 128
        %996 = vxpose.xlu0.b32.cont [10/16] 0.0, 128
        %997 = vxpose.xlu0.b32.cont [11/16] 0.0, 128
        %998 = vxpose.xlu0.b32.cont [12/16] 0.0, 128
        %999 = vxpose.xlu0.b32.cont [13/16] 0.0, 128
        %1000 = vxpose.xlu0.b32.cont [14/16] 0.0, 128
        %1001 = vxpose.xlu0.b32.cont [15/16] 0.0, 128
        %1002 = vxpose.xlu0.b32.end [16/16] 0.0, 128
        %v1003 = vpop.trf.xlu0
        %v1004 = vpop.trf.xlu0
        %v1005 = vpop.trf.xlu0
        %v1006 = vpop.trf.xlu0
        %v1007 = vpop.trf.xlu0
        %v1008 = vpop.trf.xlu0
        %v1009 = vpop.trf.xlu0
        %v1010 = vpop.trf.xlu0
        %v1011 = vpop.trf.xlu0
        %v1012 = vpop.trf.xlu0
        %v1013 = vpop.trf.xlu0
        %v1014 = vpop.trf.xlu0
        %v1015 = vpop.trf.xlu0
        %v1016 = vpop.trf.xlu0
        %v1017 = vpop.trf.xlu0
        %v1018 = vpop.trf.xlu0
        %v1019 = vpack.c.bf16 %v1004, %v1003
        %v1020 = vpack.c.bf16 %v1006, %v1005
        %v1021 = vld [vmem:[%s889] sm:$0xf]
        %v1022 = vld [vmem:[%s889 + $0x4] sm:$0xf]
        %v1023 = vld [vmem:[%s889 + $0x8] sm:$0xf]
        %v1024 = vld [vmem:[%s889 + $0xc] sm:$0xf]
        %v1025 = vld [vmem:[%s894] sm:$0xff]
        %v1026 = vld [vmem:[%s894 + $0x8] sm:$0xff]
        %v1027 = vld [vmem:[%s894 + $0x10] sm:$0xff]
        %v1028 = vld [vmem:[%s894 + $0x18] sm:$0xff]
        %1030 = vset.pattern.permute.xlu0 0
        %1031 = vperm.xlu0 %1030, %v1025
        %v1032 = vpop.permute.xlu0 %1031
        %1035 = vset.pattern.permute.xlu0 0
        %1036 = vperm.xlu0 %1035, %v1026
        %v1037 = vpop.permute.xlu0 %1036
        %1040 = vset.pattern.permute.xlu0 0
        %1041 = vperm.xlu0 %1040, %v1027
        %v1042 = vpop.permute.xlu0 %1041
        %1045 = vset.pattern.permute.xlu0 0
        %1046 = vperm.xlu0 %1045, %v1028
        %v1047 = vpop.permute.xlu0 %1046
        %v1053 = vunpack.c.l.b16 %v1021
        %v1054 = vunpack.c.l.b16 %v1022
        %v1055 = vunpack.c.l.b16 %v1023
        %v1056 = vunpack.c.l.b16 %v1024
        %v1057 = vpack.c.b16 %v1054, %v1053
        %v1058 = vpack.c.b16 %v1056, %v1055
        %v1060 = vsel %vm958, %v1057, 0
        %v1063 = vsel %vm958, %v1058, 0
        %1065 = vmatprep.subr.bf16.mxu0 0
        %1066 = vmatpush1.bf16.msra.mxu0 %v1019
        %1067 = vmatprep.subr.bf16.mxu0 0
        %1068 = vmatpush1.bf16.msra.mxu0 %v1020
        %1069 = vmatprep.subr.bf16.mxu0 0
        %1070 = vmatpush1.bf16.msra.mxu0 0
        %1071 = vmatprep.subr.bf16.mxu0 0
        %1072 = vmatpush1.bf16.msra.mxu0 0
        %1073 = vmatprep.subr.bf16.mxu0 0
        %1074 = vmatpush1.bf16.msra.mxu0 0
        %1075 = vmatprep.subr.bf16.mxu0 0
        %1076 = vmatpush1.bf16.msra.mxu0 0
        %1077 = vmatprep.subr.bf16.mxu0 0
        %1078 = vmatpush1.bf16.msra.mxu0 0
        %1079 = vmatprep.subr.bf16.mxu0 0
        %1080 = vmatpush1.bf16.msra.mxu0 0
        %1081 = vmatprep.subr.bf16.mxu0 0
        %1082 = vmatpush1.bf16.msra.mxu0 0
        %1083 = vmatprep.subr.bf16.mxu0 0
        %1084 = vmatpush1.bf16.msra.mxu0 0
        %1085 = vmatprep.subr.bf16.mxu0 0
        %1086 = vmatpush1.bf16.msra.mxu0 0
        %1087 = vmatprep.subr.bf16.mxu0 0
        %1088 = vmatpush1.bf16.msra.mxu0 0
        %1089 = vmatprep.subr.bf16.mxu0 0
        %1090 = vmatpush1.bf16.msra.mxu0 0
        %1091 = vmatprep.subr.bf16.mxu0 0
        %1092 = vmatpush1.bf16.msra.mxu0 0
        %1093 = vmatprep.subr.bf16.mxu0 0
        %1094 = vmatpush1.bf16.msra.mxu0 0
        %1095 = vmatprep.subr.bf16.mxu0 0
        %1096 = vmatpush1.bf16.msra.mxu0 0
        %1097 = vmatprep.mubr.bf16.mxu0 0
        %1098 = vmatmul.mubr.bf16.gmra.mrb[0].mxu0 %v1060
        %v1099 = vpop.f32.mrb[0].mxu0
        %v1100 = vadd.f32 %v1032, %v1099
        %v1101 = vpop.f32.mrb[0].mxu0
        %v1102 = vpop.f32.mrb[0].mxu0
        %v1103 = vadd.f32 %v1037, %v1102
        %v1104 = vpop.f32.mrb[0].mxu0
        %1105 = vmatprep.mubr.bf16.mxu0 0
        %1106 = vmatmul.mubr.bf16.gmra.mrb[0].mxu0 %v1063
        %v1107 = vpop.f32.mrb[0].mxu0
        %v1108 = vadd.f32 %v1042, %v1107
        %v1109 = vpop.f32.mrb[0].mxu0
        %v1110 = vpop.f32.mrb[0].mxu0
        %v1111 = vadd.f32 %v1047, %v1110
        %v1112 = vpop.f32.mrb[0].mxu0
        %1113 = vdwg.mxu0
        %v1114 = vld [vmem:[%s899] sm:$0xf]
        %v1115 = vld [vmem:[%s899 + $0x4] sm:$0xf]
        %v1116 = vld [vmem:[%s899 + $0x8] sm:$0xf]
        %v1117 = vld [vmem:[%s899 + $0xc] sm:$0xf]
        %v1118 = vld [vmem:[%s904] sm:$0xff]
        %v1119 = vld [vmem:[%s904 + $0x8] sm:$0xff]
        %v1120 = vld [vmem:[%s904 + $0x10] sm:$0xff]
        %v1121 = vld [vmem:[%s904 + $0x18] sm:$0xff]
        %1123 = vset.pattern.permute.xlu0 0
        %1124 = vperm.xlu0 %1123, %v1118
        %v1125 = vpop.permute.xlu0 %1124
        %1128 = vset.pattern.permute.xlu0 0
        %1129 = vperm.xlu0 %1128, %v1119
        %v1130 = vpop.permute.xlu0 %1129
        %1133 = vset.pattern.permute.xlu0 0
        %1134 = vperm.xlu0 %1133, %v1120
        %v1135 = vpop.permute.xlu0 %1134
        %1138 = vset.pattern.permute.xlu0 0
        %1139 = vperm.xlu0 %1138, %v1121
        %v1140 = vpop.permute.xlu0 %1139
        %v1146 = vunpack.c.l.b16 %v1114
        %v1147 = vunpack.c.l.b16 %v1115
        %v1148 = vunpack.c.l.b16 %v1116
        %v1149 = vunpack.c.l.b16 %v1117
        %v1150 = vpack.c.b16 %v1147, %v1146
        %v1151 = vpack.c.b16 %v1149, %v1148
        %v1153 = vsel %vm958, %v1150, 0
        %v1156 = vsel %vm958, %v1151, 0
        %1158 = vmatprep.subr.bf16.mxu0 0
        %1159 = vmatpush1.bf16.msra.mxu0 %v1019
        %1160 = vmatprep.subr.bf16.mxu0 0
        %1161 = vmatpush1.bf16.msra.mxu0 %v1020
        %1162 = vmatprep.subr.bf16.mxu0 0
        %1163 = vmatpush1.bf16.msra.mxu0 0
        %1164 = vmatprep.subr.bf16.mxu0 0
        %1165 = vmatpush1.bf16.msra.mxu0 0
        %1166 = vmatprep.subr.bf16.mxu0 0
        %1167 = vmatpush1.bf16.msra.mxu0 0
        %1168 = vmatprep.subr.bf16.mxu0 0
        %1169 = vmatpush1.bf16.msra.mxu0 0
        %1170 = vmatprep.subr.bf16.mxu0 0
        %1171 = vmatpush1.bf16.msra.mxu0 0
        %1172 = vmatprep.subr.bf16.mxu0 0
        %1173 = vmatpush1.bf16.msra.mxu0 0
        %1174 = vmatprep.subr.bf16.mxu0 0
        %1175 = vmatpush1.bf16.msra.mxu0 0
        %1176 = vmatprep.subr.bf16.mxu0 0
        %1177 = vmatpush1.bf16.msra.mxu0 0
        %1178 = vmatprep.subr.bf16.mxu0 0
        %1179 = vmatpush1.bf16.msra.mxu0 0
        %1180 = vmatprep.subr.bf16.mxu0 0
        %1181 = vmatpush1.bf16.msra.mxu0 0
        %1182 = vmatprep.subr.bf16.mxu0 0
        %1183 = vmatpush1.bf16.msra.mxu0 0
        %1184 = vmatprep.subr.bf16.mxu0 0
        %1185 = vmatpush1.bf16.msra.mxu0 0
        %1186 = vmatprep.subr.bf16.mxu0 0
        %1187 = vmatpush1.bf16.msra.mxu0 0
        %1188 = vmatprep.subr.bf16.mxu0 0
        %1189 = vmatpush1.bf16.msra.mxu0 0
        %1190 = vmatprep.mubr.bf16.mxu0 0
        %1191 = vmatmul.mubr.bf16.gmra.mrb[0].mxu0 %v1153
        %v1192 = vpop.f32.mrb[0].mxu0
        %v1193 = vadd.f32 %v1125, %v1192
        %v1194 = vpop.f32.mrb[0].mxu0
        %v1195 = vpop.f32.mrb[0].mxu0
        %v1196 = vadd.f32 %v1130, %v1195
        %v1197 = vpop.f32.mrb[0].mxu0
        %1198 = vmatprep.mubr.bf16.mxu0 0
        %1199 = vmatmul.mubr.bf16.gmra.mrb[0].mxu0 %v1156
        %v1200 = vpop.f32.mrb[0].mxu0
        %v1201 = vadd.f32 %v1135, %v1200
        %v1202 = vpop.f32.mrb[0].mxu0
        %v1203 = vpop.f32.mrb[0].mxu0
        %v1204 = vadd.f32 %v1140, %v1203
        %v1205 = vpop.f32.mrb[0].mxu0
        %1206 = vdwg.mxu0
        %v1207 = vld [vmem:[%s909] sm:$0xf]
        %v1208 = vld [vmem:[%s909 + $0x4] sm:$0xf]
        %v1209 = vld [vmem:[%s909 + $0x8] sm:$0xf]
        %v1210 = vld [vmem:[%s909 + $0xc] sm:$0xf]
        %v1211 = vld [vmem:[%s914] sm:$0xff]
        %v1212 = vld [vmem:[%s914 + $0x8] sm:$0xff]
        %v1213 = vld [vmem:[%s914 + $0x10] sm:$0xff]
        %v1214 = vld [vmem:[%s914 + $0x18] sm:$0xff]
        %1216 = vset.pattern.permute.xlu0 0
        %1217 = vperm.xlu0 %1216, %v1211
        %v1218 = vpop.permute.xlu0 %1217
        %1221 = vset.pattern.permute.xlu0 0
        %1222 = vperm.xlu0 %1221, %v1212
        %v1223 = vpop.permute.xlu0 %1222
        %1226 = vset.pattern.permute.xlu0 0
        %1227 = vperm.xlu0 %1226, %v1213
        %v1228 = vpop.permute.xlu0 %1227
        %1231 = vset.pattern.permute.xlu0 0
        %1232 = vperm.xlu0 %1231, %v1214
        %v1233 = vpop.permute.xlu0 %1232
        %v1239 = vunpack.c.l.b16 %v1207
        %v1240 = vunpack.c.l.b16 %v1208
        %v1241 = vunpack.c.l.b16 %v1209
        %v1242 = vunpack.c.l.b16 %v1210
        %v1243 = vpack.c.b16 %v1240, %v1239
        %v1244 = vpack.c.b16 %v1242, %v1241
        %v1246 = vsel %vm958, %v1243, 0
        %v1249 = vsel %vm958, %v1244, 0
        %1251 = vmatprep.subr.bf16.mxu0 0
        %1252 = vmatpush1.bf16.msra.mxu0 %v1019
        %1253 = vmatprep.subr.bf16.mxu0 0
        %1254 = vmatpush1.bf16.msra.mxu0 %v1020
        %1255 = vmatprep.subr.bf16.mxu0 0
        %1256 = vmatpush1.bf16.msra.mxu0 0
        %1257 = vmatprep.subr.bf16.mxu0 0
        %1258 = vmatpush1.bf16.msra.mxu0 0
        %1259 = vmatprep.subr.bf16.mxu0 0
        %1260 = vmatpush1.bf16.msra.mxu0 0
        %1261 = vmatprep.subr.bf16.mxu0 0
        %1262 = vmatpush1.bf16.msra.mxu0 0
        %1263 = vmatprep.subr.bf16.mxu0 0
        %1264 = vmatpush1.bf16.msra.mxu0 0
        %1265 = vmatprep.subr.bf16.mxu0 0
        %1266 = vmatpush1.bf16.msra.mxu0 0
        %1267 = vmatprep.subr.bf16.mxu0 0
        %1268 = vmatpush1.bf16.msra.mxu0 0
        %1269 = vmatprep.subr.bf16.mxu0 0
        %1270 = vmatpush1.bf16.msra.mxu0 0
        %1271 = vmatprep.subr.bf16.mxu0 0
        %1272 = vmatpush1.bf16.msra.mxu0 0
        %1273 = vmatprep.subr.bf16.mxu0 0
        %1274 = vmatpush1.bf16.msra.mxu0 0
        %1275 = vmatprep.subr.bf16.mxu0 0
        %1276 = vmatpush1.bf16.msra.mxu0 0
        %1277 = vmatprep.subr.bf16.mxu0 0
        %1278 = vmatpush1.bf16.msra.mxu0 0
        %1279 = vmatprep.subr.bf16.mxu0 0
        %1280 = vmatpush1.bf16.msra.mxu0 0
        %1281 = vmatprep.subr.bf16.mxu0 0
        %1282 = vmatpush1.bf16.msra.mxu0 0
        %1283 = vmatprep.mubr.bf16.mxu0 0
        %1284 = vmatmul.mubr.bf16.gmra.mrb[0].mxu0 %v1246
        %v1285 = vpop.f32.mrb[0].mxu0
        %v1286 = vadd.f32 %v1218, %v1285
        %v1287 = vpop.f32.mrb[0].mxu0
        %v1288 = vpop.f32.mrb[0].mxu0
        %v1289 = vadd.f32 %v1223, %v1288
        %v1290 = vpop.f32.mrb[0].mxu0
        %1291 = vmatprep.mubr.bf16.mxu0 0
        %1292 = vmatmul.mubr.bf16.gmra.mrb[0].mxu0 %v1249
        %v1293 = vpop.f32.mrb[0].mxu0
        %v1294 = vadd.f32 %v1228, %v1293
        %v1295 = vpop.f32.mrb[0].mxu0
        %v1296 = vpop.f32.mrb[0].mxu0
        %v1297 = vadd.f32 %v1233, %v1296
        %v1298 = vpop.f32.mrb[0].mxu0
        %1299 = vdwg.mxu0
        %1300 = vxpose.xlu0.b32.start [1/16] %v1100, 128
        %1301 = vxpose.xlu0.b32.cont [2/16] 0.0, 128
        %1302 = vxpose.xlu0.b32.cont [3/16] 0.0, 128
        %1303 = vxpose.xlu0.b32.cont [4/16] 0.0, 128
        %1304 = vxpose.xlu0.b32.cont [5/16] 0.0, 128
        %1305 = vxpose.xlu0.b32.cont [6/16] 0.0, 128
        %1306 = vxpose.xlu0.b32.cont [7/16] 0.0, 128
        %1307 = vxpose.xlu0.b32.cont [8/16] 0.0, 128
        %1308 = vxpose.xlu0.b32.cont [9/16] 0.0, 128
        %1309 = vxpose.xlu0.b32.cont [10/16] 0.0, 128
        %1310 = vxpose.xlu0.b32.cont [11/16] 0.0, 128
        %1311 = vxpose.xlu0.b32.cont [12/16] 0.0, 128
        %1312 = vxpose.xlu0.b32.cont [13/16] 0.0, 128
        %1313 = vxpose.xlu0.b32.cont [14/16] 0.0, 128
        %1314 = vxpose.xlu0.b32.cont [15/16] 0.0, 128
        %1315 = vxpose.xlu0.b32.end [16/16] 0.0, 128
        %v1316 = vpop.trf.xlu0
        %v1317 = vpop.trf.xlu0
        %v1318 = vpop.trf.xlu0
        %v1319 = vpop.trf.xlu0
        %v1320 = vpop.trf.xlu0
        %v1321 = vpop.trf.xlu0
        %v1322 = vpop.trf.xlu0
        %v1323 = vpop.trf.xlu0
        %v1324 = vpop.trf.xlu0
        %v1325 = vpop.trf.xlu0
        %v1326 = vpop.trf.xlu0
        %v1327 = vpop.trf.xlu0
        %v1328 = vpop.trf.xlu0
        %v1329 = vpop.trf.xlu0
        %v1330 = vpop.trf.xlu0
        %v1331 = vpop.trf.xlu0
        %1332 = vxpose.xlu0.b32.start [1/16] %v1103, 128
        %1333 = vxpose.xlu0.b32.cont [2/16] 0.0, 128
        %1334 = vxpose.xlu0.b32.cont [3/16] 0.0, 128
        %1335 = vxpose.xlu0.b32.cont [4/16] 0.0, 128
        %1336 = vxpose.xlu0.b32.cont [5/16] 0.0, 128
        %1337 = vxpose.xlu0.b32.cont [6/16] 0.0, 128
        %1338 = vxpose.xlu0.b32.cont [7/16] 0.0, 128
        %1339 = vxpose.xlu0.b32.cont [8/16] 0.0, 128
        %1340 = vxpose.xlu0.b32.cont [9/16] 0.0, 128
        %1341 = vxpose.xlu0.b32.cont [10/16] 0.0, 128
        %1342 = vxpose.xlu0.b32.cont [11/16] 0.0, 128
        %1343 = vxpose.xlu0.b32.cont [12/16] 0.0, 128
        %1344 = vxpose.xlu0.b32.cont [13/16] 0.0, 128
        %1345 = vxpose.xlu0.b32.cont [14/16] 0.0, 128
        %1346 = vxpose.xlu0.b32.cont [15/16] 0.0, 128
        %1347 = vxpose.xlu0.b32.end [16/16] 0.0, 128
        %v1348 = vpop.trf.xlu0
        %v1349 = vpop.trf.xlu0
        %v1350 = vpop.trf.xlu0
        %v1351 = vpop.trf.xlu0
        %v1352 = vpop.trf.xlu0
        %v1353 = vpop.trf.xlu0
        %v1354 = vpop.trf.xlu0
        %v1355 = vpop.trf.xlu0
        %v1356 = vpop.trf.xlu0
        %v1357 = vpop.trf.xlu0
        %v1358 = vpop.trf.xlu0
        %v1359 = vpop.trf.xlu0
        %v1360 = vpop.trf.xlu0
        %v1361 = vpop.trf.xlu0
        %v1362 = vpop.trf.xlu0
        %v1363 = vpop.trf.xlu0
        %1364 = vxpose.xlu0.b32.start [1/16] %v1108, 128
        %1365 = vxpose.xlu0.b32.cont [2/16] 0.0, 128
        %1366 = vxpose.xlu0.b32.cont [3/16] 0.0, 128
        %1367 = vxpose.xlu0.b32.cont [4/16] 0.0, 128
        %1368 = vxpose.xlu0.b32.cont [5/16] 0.0, 128
        %1369 = vxpose.xlu0.b32.cont [6/16] 0.0, 128
        %1370 = vxpose.xlu0.b32.cont [7/16] 0.0, 128
        %1371 = vxpose.xlu0.b32.cont [8/16] 0.0, 128
        %1372 = vxpose.xlu0.b32.cont [9/16] 0.0, 128
        %1373 = vxpose.xlu0.b32.cont [10/16] 0.0, 128
        %1374 = vxpose.xlu0.b32.cont [11/16] 0.0, 128
        %1375 = vxpose.xlu0.b32.cont [12/16] 0.0, 128
        %1376 = vxpose.xlu0.b32.cont [13/16] 0.0, 128
        %1377 = vxpose.xlu0.b32.cont [14/16] 0.0, 128
        %1378 = vxpose.xlu0.b32.cont [15/16] 0.0, 128
        %1379 = vxpose.xlu0.b32.end [16/16] 0.0, 128
        %v1380 = vpop.trf.xlu0
        %v1381 = vpop.trf.xlu0
        %v1382 = vpop.trf.xlu0
        %v1383 = vpop.trf.xlu0
        %v1384 = vpop.trf.xlu0
        %v1385 = vpop.trf.xlu0
        %v1386 = vpop.trf.xlu0
        %v1387 = vpop.trf.xlu0
        %v1388 = vpop.trf.xlu0
        %v1389 = vpop.trf.xlu0
        %v1390 = vpop.trf.xlu0
        %v1391 = vpop.trf.xlu0
        %v1392 = vpop.trf.xlu0
        %v1393 = vpop.trf.xlu0
        %v1394 = vpop.trf.xlu0
        %v1395 = vpop.trf.xlu0
        %1396 = vxpose.xlu0.b32.start [1/16] %v1111, 128
        %1397 = vxpose.xlu0.b32.cont [2/16] 0.0, 128
        %1398 = vxpose.xlu0.b32.cont [3/16] 0.0, 128
        %1399 = vxpose.xlu0.b32.cont [4/16] 0.0, 128
        %1400 = vxpose.xlu0.b32.cont [5/16] 0.0, 128
        %1401 = vxpose.xlu0.b32.cont [6/16] 0.0, 128
        %1402 = vxpose.xlu0.b32.cont [7/16] 0.0, 128
        %1403 = vxpose.xlu0.b32.cont [8/16] 0.0, 128
        %1404 = vxpose.xlu0.b32.cont [9/16] 0.0, 128
        %1405 = vxpose.xlu0.b32.cont [10/16] 0.0, 128
        %1406 = vxpose.xlu0.b32.cont [11/16] 0.0, 128
        %1407 = vxpose.xlu0.b32.cont [12/16] 0.0, 128
        %1408 = vxpose.xlu0.b32.cont [13/16] 0.0, 128
        %1409 = vxpose.xlu0.b32.cont [14/16] 0.0, 128
        %1410 = vxpose.xlu0.b32.cont [15/16] 0.0, 128
        %1411 = vxpose.xlu0.b32.end [16/16] 0.0, 128
        %v1412 = vpop.trf.xlu0
        %v1413 = vpop.trf.xlu0
        %v1414 = vpop.trf.xlu0
        %v1415 = vpop.trf.xlu0
        %v1416 = vpop.trf.xlu0
        %v1417 = vpop.trf.xlu0
        %v1418 = vpop.trf.xlu0
        %v1419 = vpop.trf.xlu0
        %v1420 = vpop.trf.xlu0
        %v1421 = vpop.trf.xlu0
        %v1422 = vpop.trf.xlu0
        %v1423 = vpop.trf.xlu0
        %v1424 = vpop.trf.xlu0
        %v1425 = vpop.trf.xlu0
        %v1426 = vpop.trf.xlu0
        %v1427 = vpop.trf.xlu0
        %v1428 = vpack.c.bf16 %v1316, %v1316
        %v1429 = vpack.c.bf16 %v1348, %v1348
        %v1430 = vpack.c.bf16 %v1380, %v1380
        %v1431 = vpack.c.bf16 %v1412, %v1412
        %v1432 = vpack.c.bf16 %v1193, %v1193
        %v1433 = vpack.c.bf16 %v1196, %v1196
        %v1434 = vpack.c.bf16 %v1201, %v1201
        %v1435 = vpack.c.bf16 %v1204, %v1204
        %vm1436 = vcmask 64512
        %v1438 = vsel %vm1436, %v1428, 0
        %vm1440 = vcmask 1043456
        %v1442 = vsel %vm1440, %v1432, 0
        %1444 = vmatprep.subr.bf16.mxu0 0
        %1445 = vmatpush1.bf16.msra.mxu0 %v1442
        %1446 = vmatprep.subr.bf16.mxu0 0
        %1447 = vmatpush1.bf16.msra.mxu0 0
        %1448 = vmatprep.subr.bf16.mxu0 0
        %1449 = vmatpush1.bf16.msra.mxu0 0
        %1450 = vmatprep.subr.bf16.mxu0 0
        %1451 = vmatpush1.bf16.msra.mxu0 0
        %1452 = vmatprep.subr.bf16.mxu0 0
        %1453 = vmatpush1.bf16.msra.mxu0 0
        %1454 = vmatprep.subr.bf16.mxu0 0
        %1455 = vmatpush1.bf16.msra.mxu0 0
        %1456 = vmatprep.subr.bf16.mxu0 0
        %1457 = vmatpush1.bf16.msra.mxu0 0
        %1458 = vmatprep.subr.bf16.mxu0 0
        %1459 = vmatpush1.bf16.msra.mxu0 0
        %1460 = vmatprep.subr.bf16.mxu0 0
        %1461 = vmatpush1.bf16.msra.mxu0 0
        %1462 = vmatprep.subr.bf16.mxu0 0
        %1463 = vmatpush1.bf16.msra.mxu0 0
        %1464 = vmatprep.subr.bf16.mxu0 0
        %1465 = vmatpush1.bf16.msra.mxu0 0
        %1466 = vmatprep.subr.bf16.mxu0 0
        %1467 = vmatpush1.bf16.msra.mxu0 0
        %1468 = vmatprep.subr.bf16.mxu0 0
        %1469 = vmatpush1.bf16.msra.mxu0 0
        %1470 = vmatprep.subr.bf16.mxu0 0
        %1471 = vmatpush1.bf16.msra.mxu0 0
        %1472 = vmatprep.subr.bf16.mxu0 0
        %1473 = vmatpush1.bf16.msra.mxu0 0
        %1474 = vmatprep.subr.bf16.mxu0 0
        %1475 = vmatpush1.bf16.msra.mxu0 0
        %1476 = vmatprep.mubr.bf16.mxu0 0
        %1477 = vmatmul.mubr.bf16.gmra.mrb[0].mxu0 %v1438
        %v1478 = vpop.f32.mrb[0].mxu0
        %v1479 = vadd.f32 0.0, %v1478
        %v1480 = vpop.f32.mrb[0].mxu0
        %v1481 = vpop.f32.mrb[0].mxu0
        %v1482 = vpop.f32.mrb[0].mxu0
        %1483 = vdwg.mxu0
        %v1485 = vsel %vm1436, %v1429, 0
        %v1488 = vsel %vm1440, %v1433, 0
        %1490 = vmatprep.subr.bf16.mxu0 0
        %1491 = vmatpush1.bf16.msra.mxu0 %v1488
        %1492 = vmatprep.subr.bf16.mxu0 0
        %1493 = vmatpush1.bf16.msra.mxu0 0
        %1494 = vmatprep.subr.bf16.mxu0 0
        %1495 = vmatpush1.bf16.msra.mxu0 0
        %1496 = vmatprep.subr.bf16.mxu0 0
        %1497 = vmatpush1.bf16.msra.mxu0 0
        %1498 = vmatprep.subr.bf16.mxu0 0
        %1499 = vmatpush1.bf16.msra.mxu0 0
        %1500 = vmatprep.subr.bf16.mxu0 0
        %1501 = vmatpush1.bf16.msra.mxu0 0
        %1502 = vmatprep.subr.bf16.mxu0 0
        %1503 = vmatpush1.bf16.msra.mxu0 0
        %1504 = vmatprep.subr.bf16.mxu0 0
        %1505 = vmatpush1.bf16.msra.mxu0 0
        %1506 = vmatprep.subr.bf16.mxu0 0
        %1507 = vmatpush1.bf16.msra.mxu0 0
        %1508 = vmatprep.subr.bf16.mxu0 0
        %1509 = vmatpush1.bf16.msra.mxu0 0
        %1510 = vmatprep.subr.bf16.mxu0 0
        %1511 = vmatpush1.bf16.msra.mxu0 0
        %1512 = vmatprep.subr.bf16.mxu0 0
        %1513 = vmatpush1.bf16.msra.mxu0 0
        %1514 = vmatprep.subr.bf16.mxu0 0
        %1515 = vmatpush1.bf16.msra.mxu0 0
        %1516 = vmatprep.subr.bf16.mxu0 0
        %1517 = vmatpush1.bf16.msra.mxu0 0
        %1518 = vmatprep.subr.bf16.mxu0 0
        %1519 = vmatpush1.bf16.msra.mxu0 0
        %1520 = vmatprep.subr.bf16.mxu0 0
        %1521 = vmatpush1.bf16.msra.mxu0 0
        %1522 = vmatprep.mubr.bf16.mxu0 0
        %1523 = vmatmul.mubr.bf16.gmra.mrb[0].mxu0 %v1485
        %v1524 = vpop.f32.mrb[0].mxu0
        %v1525 = vadd.f32 0.0, %v1524
        %v1526 = vpop.f32.mrb[0].mxu0
        %v1527 = vpop.f32.mrb[0].mxu0
        %v1528 = vpop.f32.mrb[0].mxu0
        %1529 = vdwg.mxu0
        %v1531 = vsel %vm1436, %v1430, 0
        %v1534 = vsel %vm1440, %v1434, 0
        %1536 = vmatprep.subr.bf16.mxu0 0
        %1537 = vmatpush1.bf16.msra.mxu0 %v1534
        %1538 = vmatprep.subr.bf16.mxu0 0
        %1539 = vmatpush1.bf16.msra.mxu0 0
        %1540 = vmatprep.subr.bf16.mxu0 0
        %1541 = vmatpush1.bf16.msra.mxu0 0
        %1542 = vmatprep.subr.bf16.mxu0 0
        %1543 = vmatpush1.bf16.msra.mxu0 0
        %1544 = vmatprep.subr.bf16.mxu0 0
        %1545 = vmatpush1.bf16.msra.mxu0 0
        %1546 = vmatprep.subr.bf16.mxu0 0
        %1547 = vmatpush1.bf16.msra.mxu0 0
        %1548 = vmatprep.subr.bf16.mxu0 0
        %1549 = vmatpush1.bf16.msra.mxu0 0
        %1550 = vmatprep.subr.bf16.mxu0 0
        %1551 = vmatpush1.bf16.msra.mxu0 0
        %1552 = vmatprep.subr.bf16.mxu0 0
        %1553 = vmatpush1.bf16.msra.mxu0 0
        %1554 = vmatprep.subr.bf16.mxu0 0
        %1555 = vmatpush1.bf16.msra.mxu0 0
        %1556 = vmatprep.subr.bf16.mxu0 0
        %1557 = vmatpush1.bf16.msra.mxu0 0
        %1558 = vmatprep.subr.bf16.mxu0 0
        %1559 = vmatpush1.bf16.msra.mxu0 0
        %1560 = vmatprep.subr.bf16.mxu0 0
        %1561 = vmatpush1.bf16.msra.mxu0 0
        %1562 = vmatprep.subr.bf16.mxu0 0
        %1563 = vmatpush1.bf16.msra.mxu0 0
        %1564 = vmatprep.subr.bf16.mxu0 0
        %1565 = vmatpush1.bf16.msra.mxu0 0
        %1566 = vmatprep.subr.bf16.mxu0 0
        %1567 = vmatpush1.bf16.msra.mxu0 0
        %1568 = vmatprep.mubr.bf16.mxu0 0
        %1569 = vmatmul.mubr.bf16.gmra.mrb[0].mxu0 %v1531
        %v1570 = vpop.f32.mrb[0].mxu0
        %v1571 = vadd.f32 0.0, %v1570
        %v1572 = vpop.f32.mrb[0].mxu0
        %v1573 = vpop.f32.mrb[0].mxu0
        %v1574 = vpop.f32.mrb[0].mxu0
        %1575 = vdwg.mxu0
        %v1577 = vsel %vm1436, %v1431, 0
        %v1580 = vsel %vm1440, %v1435, 0
        %1582 = vmatprep.subr.bf16.mxu0 0
        %1583 = vmatpush1.bf16.msra.mxu0 %v1580
        %1584 = vmatprep.subr.bf16.mxu0 0
        %1585 = vmatpush1.bf16.msra.mxu0 0
        %1586 = vmatprep.subr.bf16.mxu0 0
        %1587 = vmatpush1.bf16.msra.mxu0 0
        %1588 = vmatprep.subr.bf16.mxu0 0
        %1589 = vmatpush1.bf16.msra.mxu0 0
        %1590 = vmatprep.subr.bf16.mxu0 0
        %1591 = vmatpush1.bf16.msra.mxu0 0
        %1592 = vmatprep.subr.bf16.mxu0 0
        %1593 = vmatpush1.bf16.msra.mxu0 0
        %1594 = vmatprep.subr.bf16.mxu0 0
        %1595 = vmatpush1.bf16.msra.mxu0 0
        %1596 = vmatprep.subr.bf16.mxu0 0
        %1597 = vmatpush1.bf16.msra.mxu0 0
        %1598 = vmatprep.subr.bf16.mxu0 0
        %1599 = vmatpush1.bf16.msra.mxu0 0
        %1600 = vmatprep.subr.bf16.mxu0 0
        %1601 = vmatpush1.bf16.msra.mxu0 0
        %1602 = vmatprep.subr.bf16.mxu0 0
        %1603 = vmatpush1.bf16.msra.mxu0 0
        %1604 = vmatprep.subr.bf16.mxu0 0
        %1605 = vmatpush1.bf16.msra.mxu0 0
        %1606 = vmatprep.subr.bf16.mxu0 0
        %1607 = vmatpush1.bf16.msra.mxu0 0
        %1608 = vmatprep.subr.bf16.mxu0 0
        %1609 = vmatpush1.bf16.msra.mxu0 0
        %1610 = vmatprep.subr.bf16.mxu0 0
        %1611 = vmatpush1.bf16.msra.mxu0 0
        %1612 = vmatprep.subr.bf16.mxu0 0
        %1613 = vmatpush1.bf16.msra.mxu0 0
        %1614 = vmatprep.mubr.bf16.mxu0 0
        %1615 = vmatmul.mubr.bf16.gmra.mrb[0].mxu0 %v1577
        %v1616 = vpop.f32.mrb[0].mxu0
        %v1617 = vadd.f32 0.0, %v1616
        %v1618 = vpop.f32.mrb[0].mxu0
        %v1619 = vpop.f32.mrb[0].mxu0
        %v1620 = vpop.f32.mrb[0].mxu0
        %1621 = vdwg.mxu0
        %v1622 = vmul.f32 %v1479, 0.35355338
        %v1623 = vmul.f32 %v1525, 0.35355338
        %v1624 = vmul.f32 %v1571, 0.35355338
        %v1625 = vmul.f32 %v1617, 0.35355338
        %v1626 = vsel %vm1436, %v1622, -inf
        %1627 = vmax.xlane.f32.xlu0 %v1626
        %v1628 = vpop.xlane.xlu0 %1627
        %v1629 = vsel %vm1436, %v1623, -inf
        %1630 = vmax.xlane.f32.xlu0 %v1629
        %v1631 = vpop.xlane.xlu0 %1630
        %v1632 = vsel %vm1436, %v1624, -inf
        %1633 = vmax.xlane.f32.xlu0 %v1632
        %v1634 = vpop.xlane.xlu0 %1633
        %v1635 = vsel %vm1436, %v1625, -inf
        %1636 = vmax.xlane.f32.xlu0 %v1635
        %v1637 = vpop.xlane.xlu0 %1636
        %v1638 = vsub.f32 %v1622, %v1628
        %v1639 = vsub.f32 %v1623, %v1631
        %v1640 = vsub.f32 %v1624, %v1634
        %v1641 = vsub.f32 %v1625, %v1637
        %v1642 = vmul.f32 %v1638, 1.442695
        %v1643 = vpow.pop %v1642
        %v1644 = vmul.f32 %v1639, 1.442695
        %v1645 = vpow.pop %v1644
        %v1646 = vmul.f32 %v1640, 1.442695
        %v1647 = vpow.pop %v1646
        %v1648 = vmul.f32 %v1641, 1.442695
        %v1649 = vpow.pop %v1648
        %v1650 = vsel %vm1436, %v1643, 0.0
        %1651 = vadd.xlane.f32.xlu0 %v1650
        %v1652 = vpop.xlane.xlu0 %1651
        %v1653 = vsel %vm1436, %v1645, 0.0
        %1654 = vadd.xlane.f32.xlu0 %v1653
        %v1655 = vpop.xlane.xlu0 %1654
        %v1656 = vsel %vm1436, %v1647, 0.0
        %1657 = vadd.xlane.f32.xlu0 %v1656
        %v1658 = vpop.xlane.xlu0 %1657
        %v1659 = vsel %vm1436, %v1649, 0.0
        %1660 = vadd.xlane.f32.xlu0 %v1659
        %v1661 = vpop.xlane.xlu0 %1660
        %v1662 = vrcp.pop %v1652
        %v1663 = vrcp.pop %v1655
        %v1664 = vrcp.pop %v1658
        %v1665 = vrcp.pop %v1661
        %v1666 = vmul.f32 %v1643, %v1662
        %v1667 = vmul.f32 %v1645, %v1663
        %v1668 = vmul.f32 %v1647, %v1664
        %v1669 = vmul.f32 %v1649, %v1665
        %v1670 = vpack.c.bf16 %v1286, %v1286
        %v1671 = vpack.c.bf16 %v1289, %v1289
        %v1672 = vpack.c.bf16 %v1294, %v1294
        %v1673 = vpack.c.bf16 %v1297, %v1297
        %v1674 = vpack.c.bf16 %v1666, %v1666
        %v1675 = vpack.c.bf16 %v1667, %v1667
        %v1676 = vpack.c.bf16 %v1668, %v1668
        %v1677 = vpack.c.bf16 %v1669, %v1669
        %v1679 = vsel %vm1436, %v1670, 0
        %v1682 = vsel %vm1436, %v1674, 0
        %1684 = vmatprep.subr.bf16.mxu0 0
        %1685 = vmatpush1.bf16.xpose.msra.mxu0 %v1682
        %1686 = vmatprep.subr.bf16.mxu0 0
        %1687 = vmatpush1.bf16.xpose.msra.mxu0 0
        %1688 = vmatprep.subr.bf16.mxu0 0
        %1689 = vmatpush1.bf16.xpose.msra.mxu0 0
        %1690 = vmatprep.subr.bf16.mxu0 0
        %1691 = vmatpush1.bf16.xpose.msra.mxu0 0
        %1692 = vmatprep.subr.bf16.mxu0 0
        %1693 = vmatpush1.bf16.xpose.msra.mxu0 0
        %1694 = vmatprep.subr.bf16.mxu0 0
        %1695 = vmatpush1.bf16.xpose.msra.mxu0 0
        %1696 = vmatprep.subr.bf16.mxu0 0
        %1697 = vmatpush1.bf16.xpose.msra.mxu0 0
        %1698 = vmatprep.subr.bf16.mxu0 0
        %1699 = vmatpush1.bf16.xpose.msra.mxu0 0
        %1700 = vmatprep.subr.bf16.mxu0 0
        %1701 = vmatpush1.bf16.xpose.msra.mxu0 0
        %1702 = vmatprep.subr.bf16.mxu0 0
        %1703 = vmatpush1.bf16.xpose.msra.mxu0 0
        %1704 = vmatprep.subr.bf16.mxu0 0
        %1705 = vmatpush1.bf16.xpose.msra.mxu0 0
        %1706 = vmatprep.subr.bf16.mxu0 0
        %1707 = vmatpush1.bf16.xpose.msra.mxu0 0
        %1708 = vmatprep.subr.bf16.mxu0 0
        %1709 = vmatpush1.bf16.xpose.msra.mxu0 0
        %1710 = vmatprep.subr.bf16.mxu0 0
        %1711 = vmatpush1.bf16.xpose.msra.mxu0 0
        %1712 = vmatprep.subr.bf16.mxu0 0
        %1713 = vmatpush1.bf16.xpose.msra.mxu0 0
        %1714 = vmatprep.subr.bf16.mxu0 0
        %1715 = vmatpush1.bf16.xpose.msra.mxu0 0
        %1716 = vmatprep.mubr.bf16.mxu0 0
        %1717 = vmatmul.mubr.bf16.gmra.mrb[0].mxu0 %v1679
        %v1718 = vpop.f32.mrb[0].mxu0
        %v1719 = vadd.f32 0.0, %v1718
        %v1720 = vpop.f32.mrb[0].mxu0
        %v1721 = vpop.f32.mrb[0].mxu0
        %v1722 = vpop.f32.mrb[0].mxu0
        %1723 = vdwg.mxu0
        %v1725 = vsel %vm1436, %v1671, 0
        %v1728 = vsel %vm1436, %v1675, 0
        %1730 = vmatprep.subr.bf16.mxu0 0
        %1731 = vmatpush1.bf16.xpose.msra.mxu0 %v1728
        %1732 = vmatprep.subr.bf16.mxu0 0
        %1733 = vmatpush1.bf16.xpose.msra.mxu0 0
        %1734 = vmatprep.subr.bf16.mxu0 0
        %1735 = vmatpush1.bf16.xpose.msra.mxu0 0
        %1736 = vmatprep.subr.bf16.mxu0 0
        %1737 = vmatpush1.bf16.xpose.msra.mxu0 0
        %1738 = vmatprep.subr.bf16.mxu0 0
        %1739 = vmatpush1.bf16.xpose.msra.mxu0 0
        %1740 = vmatprep.subr.bf16.mxu0 0
        %1741 = vmatpush1.bf16.xpose.msra.mxu0 0
        %1742 = vmatprep.subr.bf16.mxu0 0
        %1743 = vmatpush1.bf16.xpose.msra.mxu0 0
        %1744 = vmatprep.subr.bf16.mxu0 0
        %1745 = vmatpush1.bf16.xpose.msra.mxu0 0
        %1746 = vmatprep.subr.bf16.mxu0 0
        %1747 = vmatpush1.bf16.xpose.msra.mxu0 0
        %1748 = vmatprep.subr.bf16.mxu0 0
        %1749 = vmatpush1.bf16.xpose.msra.mxu0 0
        %1750 = vmatprep.subr.bf16.mxu0 0
        %1751 = vmatpush1.bf16.xpose.msra.mxu0 0
        %1752 = vmatprep.subr.bf16.mxu0 0
        %1753 = vmatpush1.bf16.xpose.msra.mxu0 0
        %1754 = vmatprep.subr.bf16.mxu0 0
        %1755 = vmatpush1.bf16.xpose.msra.mxu0 0
        %1756 = vmatprep.subr.bf16.mxu0 0
        %1757 = vmatpush1.bf16.xpose.msra.mxu0 0
        %1758 = vmatprep.subr.bf16.mxu0 0
        %1759 = vmatpush1.bf16.xpose.msra.mxu0 0
        %1760 = vmatprep.subr.bf16.mxu0 0
        %1761 = vmatpush1.bf16.xpose.msra.mxu0 0
        %1762 = vmatprep.mubr.bf16.mxu0 0
        %1763 = vmatmul.mubr.bf16.gmra.mrb[0].mxu0 %v1725
        %v1764 = vpop.f32.mrb[0].mxu0
        %v1765 = vadd.f32 0.0, %v1764
        %v1766 = vpop.f32.mrb[0].mxu0
        %v1767 = vpop.f32.mrb[0].mxu0
        %v1768 = vpop.f32.mrb[0].mxu0
        %1769 = vdwg.mxu0
        %v1771 = vsel %vm1436, %v1672, 0
        %v1774 = vsel %vm1436, %v1676, 0
        %1776 = vmatprep.subr.bf16.mxu0 0
        %1777 = vmatpush1.bf16.xpose.msra.mxu0 %v1774
        %1778 = vmatprep.subr.bf16.mxu0 0
        %1779 = vmatpush1.bf16.xpose.msra.mxu0 0
        %1780 = vmatprep.subr.bf16.mxu0 0
        %1781 = vmatpush1.bf16.xpose.msra.mxu0 0
        %1782 = vmatprep.subr.bf16.mxu0 0
        %1783 = vmatpush1.bf16.xpose.msra.mxu0 0
        %1784 = vmatprep.subr.bf16.mxu0 0
        %1785 = vmatpush1.bf16.xpose.msra.mxu0 0
        %1786 = vmatprep.subr.bf16.mxu0 0
        %1787 = vmatpush1.bf16.xpose.msra.mxu0 0
        %1788 = vmatprep.subr.bf16.mxu0 0
        %1789 = vmatpush1.bf16.xpose.msra.mxu0 0
        %1790 = vmatprep.subr.bf16.mxu0 0
        %1791 = vmatpush1.bf16.xpose.msra.mxu0 0
        %1792 = vmatprep.subr.bf16.mxu0 0
        %1793 = vmatpush1.bf16.xpose.msra.mxu0 0
        %1794 = vmatprep.subr.bf16.mxu0 0
        %1795 = vmatpush1.bf16.xpose.msra.mxu0 0
        %1796 = vmatprep.subr.bf16.mxu0 0
        %1797 = vmatpush1.bf16.xpose.msra.mxu0 0
        %1798 = vmatprep.subr.bf16.mxu0 0
        %1799 = vmatpush1.bf16.xpose.msra.mxu0 0
        %1800 = vmatprep.subr.bf16.mxu0 0
        %1801 = vmatpush1.bf16.xpose.msra.mxu0 0
        %1802 = vmatprep.subr.bf16.mxu0 0
        %1803 = vmatpush1.bf16.xpose.msra.mxu0 0
        %1804 = vmatprep.subr.bf16.mxu0 0
        %1805 = vmatpush1.bf16.xpose.msra.mxu0 0
        %1806 = vmatprep.subr.bf16.mxu0 0
        %1807 = vmatpush1.bf16.xpose.msra.mxu0 0
        %1808 = vmatprep.mubr.bf16.mxu0 0
        %1809 = vmatmul.mubr.bf16.gmra.mrb[0].mxu0 %v1771
        %v1810 = vpop.f32.mrb[0].mxu0
        %v1811 = vadd.f32 0.0, %v1810
        %v1812 = vpop.f32.mrb[0].mxu0
        %v1813 = vpop.f32.mrb[0].mxu0
        %v1814 = vpop.f32.mrb[0].mxu0
        %1815 = vdwg.mxu0
        %v1817 = vsel %vm1436, %v1673, 0
        %v1820 = vsel %vm1436, %v1677, 0
        %1822 = vmatprep.subr.bf16.mxu0 0
        %1823 = vmatpush1.bf16.xpose.msra.mxu0 %v1820
        %1824 = vmatprep.subr.bf16.mxu0 0
        %1825 = vmatpush1.bf16.xpose.msra.mxu0 0
        %1826 = vmatprep.subr.bf16.mxu0 0
        %1827 = vmatpush1.bf16.xpose.msra.mxu0 0
        %1828 = vmatprep.subr.bf16.mxu0 0
        %1829 = vmatpush1.bf16.xpose.msra.mxu0 0
        %1830 = vmatprep.subr.bf16.mxu0 0
        %1831 = vmatpush1.bf16.xpose.msra.mxu0 0
        %1832 = vmatprep.subr.bf16.mxu0 0
        %1833 = vmatpush1.bf16.xpose.msra.mxu0 0
        %1834 = vmatprep.subr.bf16.mxu0 0
        %1835 = vmatpush1.bf16.xpose.msra.mxu0 0
        %1836 = vmatprep.subr.bf16.mxu0 0
        %1837 = vmatpush1.bf16.xpose.msra.mxu0 0
        %1838 = vmatprep.subr.bf16.mxu0 0
        %1839 = vmatpush1.bf16.xpose.msra.mxu0 0
        %1840 = vmatprep.subr.bf16.mxu0 0
        %1841 = vmatpush1.bf16.xpose.msra.mxu0 0
        %1842 = vmatprep.subr.bf16.mxu0 0
        %1843 = vmatpush1.bf16.xpose.msra.mxu0 0
        %1844 = vmatprep.subr.bf16.mxu0 0
        %1845 = vmatpush1.bf16.xpose.msra.mxu0 0
        %1846 = vmatprep.subr.bf16.mxu0 0
        %1847 = vmatpush1.bf16.xpose.msra.mxu0 0
        %1848 = vmatprep.subr.bf16.mxu0 0
        %1849 = vmatpush1.bf16.xpose.msra.mxu0 0
        %1850 = vmatprep.subr.bf16.mxu0 0
        %1851 = vmatpush1.bf16.xpose.msra.mxu0 0
        %1852 = vmatprep.subr.bf16.mxu0 0
        %1853 = vmatpush1.bf16.xpose.msra.mxu0 0
        %1854 = vmatprep.mubr.bf16.mxu0 0
        %1855 = vmatmul.mubr.bf16.gmra.mrb[0].mxu0 %v1817
        %v1856 = vpop.f32.mrb[0].mxu0
        %v1857 = vadd.f32 0.0, %v1856
        %v1858 = vpop.f32.mrb[0].mxu0
        %v1859 = vpop.f32.mrb[0].mxu0
        %v1860 = vpop.f32.mrb[0].mxu0
        %1861 = vdwg.mxu0
        %v1862 = vpack.c.bf16 %v1765, %v1719
        %v1863 = vpack.c.bf16 %v1857, %v1811
        %v1864 = vld [vmem:[%s919] sm:$0xf]
        %v1865 = vld [vmem:[%s919 + $0x4] sm:$0xf]
        %v1866 = vld [vmem:[%s919 + $0x8] sm:$0xf]
        %v1867 = vld [vmem:[%s919 + $0xc] sm:$0xf]
        %v1868 = vld [vmem:[%s924] sm:$0xff]
        %v1869 = vld [vmem:[%s924 + $0x8] sm:$0xff]
        %v1870 = vld [vmem:[%s924 + $0x10] sm:$0xff]
        %v1871 = vld [vmem:[%s924 + $0x18] sm:$0xff]
        %1873 = vset.pattern.permute.xlu0 0
        %1874 = vperm.xlu0 %1873, %v1868
        %v1875 = vpop.permute.xlu0 %1874
        %1878 = vset.pattern.permute.xlu0 0
        %1879 = vperm.xlu0 %1878, %v1869
        %v1880 = vpop.permute.xlu0 %1879
        %1883 = vset.pattern.permute.xlu0 0
        %1884 = vperm.xlu0 %1883, %v1870
        %v1885 = vpop.permute.xlu0 %1884
        %1888 = vset.pattern.permute.xlu0 0
        %1889 = vperm.xlu0 %1888, %v1871
        %v1890 = vpop.permute.xlu0 %1889
        %v1896 = vunpack.c.l.b16 %v1864
        %v1897 = vunpack.c.l.b16 %v1865
        %v1898 = vunpack.c.l.b16 %v1866
        %v1899 = vunpack.c.l.b16 %v1867
        %v1900 = vpack.c.b16 %v1897, %v1896
        %v1901 = vpack.c.b16 %v1899, %v1898
        %v1903 = vsel %vm958, %v1900, 0
        %v1906 = vsel %vm958, %v1901, 0
        %1908 = vmatprep.subr.bf16.mxu0 0
        %1909 = vmatpush1.bf16.msra.mxu0 %v1862
        %1910 = vmatprep.subr.bf16.mxu0 0
        %1911 = vmatpush1.bf16.msra.mxu0 %v1863
        %1912 = vmatprep.subr.bf16.mxu0 0
        %1913 = vmatpush1.bf16.msra.mxu0 0
        %1914 = vmatprep.subr.bf16.mxu0 0
        %1915 = vmatpush1.bf16.msra.mxu0 0
        %1916 = vmatprep.subr.bf16.mxu0 0
        %1917 = vmatpush1.bf16.msra.mxu0 0
        %1918 = vmatprep.subr.bf16.mxu0 0
        %1919 = vmatpush1.bf16.msra.mxu0 0
        %1920 = vmatprep.subr.bf16.mxu0 0
        %1921 = vmatpush1.bf16.msra.mxu0 0
        %1922 = vmatprep.subr.bf16.mxu0 0
        %1923 = vmatpush1.bf16.msra.mxu0 0
        %1924 = vmatprep.subr.bf16.mxu0 0
        %1925 = vmatpush1.bf16.msra.mxu0 0
        %1926 = vmatprep.subr.bf16.mxu0 0
        %1927 = vmatpush1.bf16.msra.mxu0 0
        %1928 = vmatprep.subr.bf16.mxu0 0
        %1929 = vmatpush1.bf16.msra.mxu0 0
        %1930 = vmatprep.subr.bf16.mxu0 0
        %1931 = vmatpush1.bf16.msra.mxu0 0
        %1932 = vmatprep.subr.bf16.mxu0 0
        %1933 = vmatpush1.bf16.msra.mxu0 0
        %1934 = vmatprep.subr.bf16.mxu0 0
        %1935 = vmatpush1.bf16.msra.mxu0 0
        %1936 = vmatprep.subr.bf16.mxu0 0
        %1937 = vmatpush1.bf16.msra.mxu0 0
        %1938 = vmatprep.subr.bf16.mxu0 0
        %1939 = vmatpush1.bf16.msra.mxu0 0
        %1940 = vmatprep.mubr.bf16.mxu0 0
        %1941 = vmatmul.mubr.bf16.gmra.mrb[0].mxu0 %v1903
        %v1942 = vpop.f32.mrb[0].mxu0
        %v1943 = vadd.f32 %v1875, %v1942
        %v1944 = vpop.f32.mrb[0].mxu0
        %v1945 = vpop.f32.mrb[0].mxu0
        %v1946 = vadd.f32 %v1880, %v1945
        %v1947 = vpop.f32.mrb[0].mxu0
        %1948 = vmatprep.mubr.bf16.mxu0 0
        %1949 = vmatmul.mubr.bf16.gmra.mrb[0].mxu0 %v1906
        %v1950 = vpop.f32.mrb[0].mxu0
        %v1951 = vadd.f32 %v1885, %v1950
        %v1952 = vpop.f32.mrb[0].mxu0
        %v1953 = vpop.f32.mrb[0].mxu0
        %v1954 = vadd.f32 %v1890, %v1953
        %v1955 = vpop.f32.mrb[0].mxu0
        %1956 = vdwg.mxu0
        %1957 = vxpose.xlu0.b32.start [1/16] %v1943, 128
        %1958 = vxpose.xlu0.b32.cont [2/16] %v1946, 128
        %1959 = vxpose.xlu0.b32.cont [3/16] %v1951, 128
        %1960 = vxpose.xlu0.b32.cont [4/16] %v1954, 128
        %1961 = vxpose.xlu0.b32.cont [5/16] 0.0, 128
        %1962 = vxpose.xlu0.b32.cont [6/16] 0.0, 128
        %1963 = vxpose.xlu0.b32.cont [7/16] 0.0, 128
        %1964 = vxpose.xlu0.b32.cont [8/16] 0.0, 128
        %1965 = vxpose.xlu0.b32.cont [9/16] 0.0, 128
        %1966 = vxpose.xlu0.b32.cont [10/16] 0.0, 128
        %1967 = vxpose.xlu0.b32.cont [11/16] 0.0, 128
        %1968 = vxpose.xlu0.b32.cont [12/16] 0.0, 128
        %1969 = vxpose.xlu0.b32.cont [13/16] 0.0, 128
        %1970 = vxpose.xlu0.b32.cont [14/16] 0.0, 128
        %1971 = vxpose.xlu0.b32.cont [15/16] 0.0, 128
        %1972 = vxpose.xlu0.b32.end [16/16] 0.0, 128
        %v1973 = vpop.trf.xlu0
        %v1974 = vpop.trf.xlu0
        %v1975 = vpop.trf.xlu0
        %v1976 = vpop.trf.xlu0
        %v1977 = vpop.trf.xlu0
        %v1978 = vpop.trf.xlu0
        %v1979 = vpop.trf.xlu0
        %v1980 = vpop.trf.xlu0
        %v1981 = vpop.trf.xlu0
        %v1982 = vpop.trf.xlu0
        %v1983 = vpop.trf.xlu0
        %v1984 = vpop.trf.xlu0
        %v1985 = vpop.trf.xlu0
        %v1986 = vpop.trf.xlu0
        %v1987 = vpop.trf.xlu0
        %v1988 = vpop.trf.xlu0
        %v1989 = vadd.f32 %v955, %v1973
        %v1990 = vld [vmem:[%s927] sm:$0x1]
        %v1991 = vld [vmem:[%s930] sm:$0x1]
        %v1992 = vsel %vm958, %v1989, 0.0
        %1993 = vadd.xlane.f32.xlu0 %v1992
        %v1994 = vpop.xlane.xlu0 %1993
        %v1995 = vmul.f32 %v1994, %v962
        %v1996 = vsub.f32 %v1989, %v1995
        %v1997 = vmul.f32 %v1996, %v1996
        %v1998 = vsel %vm958, %v1997, 0.0
        %1999 = vadd.xlane.f32.xlu0 %v1998
        %v2000 = vpop.xlane.xlu0 %1999
        %v2001 = vmul.f32 %v2000, %v962
        %v2002 = vadd.f32 %v2001, 1e-05
        %v2003 = vrsqrt.pop %v2002
        %v2004 = vmul.f32 %v1996, %v2003
        %v2006 = vlaneseq
        %v2007 = vshrl.u32 %v2006, 7
        %v2008 = vsub.s32 0, %v2007
        %v2009 = vrot.slane %v1990, %v2008
        %v2011 = vmul.f32 %v2004, %v2009
        %v2013 = vlaneseq
        %v2014 = vshrl.u32 %v2013, 7
        %v2015 = vsub.s32 0, %v2014
        %v2016 = vrot.slane %v1991, %v2015
        %v2018 = vadd.f32 %v2011, %v2016
        %v2019 = vpack.c.bf16 %v2018, %v2018
        %v2020 = vld [vmem:[%s935] sm:$0xf]
        %v2021 = vld [vmem:[%s935 + $0x4] sm:$0xf]
        %v2022 = vld [vmem:[%s935 + $0x8] sm:$0xf]
        %v2023 = vld [vmem:[%s935 + $0xc] sm:$0xf]
        %v2024 = vld [vmem:[%s938] sm:$0x1]
        %v2026 = vlaneseq
        %v2027 = vshrl.u32 %v2026, 7
        %v2028 = vsub.s32 0, %v2027
        %v2029 = vrot.slane %v2024, %v2028
        %v2035 = vunpack.c.l.b16 %v2020
        %v2036 = vunpack.c.l.b16 %v2021
        %v2037 = vunpack.c.l.b16 %v2022
        %v2038 = vunpack.c.l.b16 %v2023
        %v2039 = vpack.c.b16 %v2036, %v2035
        %v2040 = vpack.c.b16 %v2038, %v2037
        %v2044 = vsel %vm958, %v2019, 0
        %2046 = vmatprep.subr.bf16.mxu0 0
        %2047 = vmatpush1.bf16.msra.mxu0 %v2039
        %2048 = vmatprep.subr.bf16.mxu0 0
        %2049 = vmatpush1.bf16.msra.mxu0 %v2040
        %2050 = vmatprep.subr.bf16.mxu0 0
        %2051 = vmatpush1.bf16.msra.mxu0 0
        %2052 = vmatprep.subr.bf16.mxu0 0
        %2053 = vmatpush1.bf16.msra.mxu0 0
        %2054 = vmatprep.subr.bf16.mxu0 0
        %2055 = vmatpush1.bf16.msra.mxu0 0
        %2056 = vmatprep.subr.bf16.mxu0 0
        %2057 = vmatpush1.bf16.msra.mxu0 0
        %2058 = vmatprep.subr.bf16.mxu0 0
        %2059 = vmatpush1.bf16.msra.mxu0 0
        %2060 = vmatprep.subr.bf16.mxu0 0
        %2061 = vmatpush1.bf16.msra.mxu0 0
        %2062 = vmatprep.subr.bf16.mxu0 0
        %2063 = vmatpush1.bf16.msra.mxu0 0
        %2064 = vmatprep.subr.bf16.mxu0 0
        %2065 = vmatpush1.bf16.msra.mxu0 0
        %2066 = vmatprep.subr.bf16.mxu0 0
        %2067 = vmatpush1.bf16.msra.mxu0 0
        %2068 = vmatprep.subr.bf16.mxu0 0
        %2069 = vmatpush1.bf16.msra.mxu0 0
        %2070 = vmatprep.subr.bf16.mxu0 0
        %2071 = vmatpush1.bf16.msra.mxu0 0
        %2072 = vmatprep.subr.bf16.mxu0 0
        %2073 = vmatpush1.bf16.msra.mxu0 0
        %2074 = vmatprep.subr.bf16.mxu0 0
        %2075 = vmatpush1.bf16.msra.mxu0 0
        %2076 = vmatprep.subr.bf16.mxu0 0
        %2077 = vmatpush1.bf16.msra.mxu0 0
        %2078 = vmatprep.mubr.bf16.mxu0 0
        %2079 = vmatmul.mubr.bf16.gmra.mrb[0].mxu0 %v2044
        %v2080 = vpop.f32.mrb[0].mxu0
        %v2081 = vadd.f32 %v2029, %v2080
        %v2082 = vpop.f32.mrb[0].mxu0
        %v2083 = vpop.f32.mrb[0].mxu0
        %v2084 = vpop.f32.mrb[0].mxu0
        %2085 = vdwg.mxu0
        %v2086 = vmul.f32 %v2081, 0.5
        %v2087 = vmul.f32 %v2081, 0.044715
        %v2088 = vmul.f32 %v2087, %v2081
        %v2089 = vmul.f32 %v2088, %v2081
        %v2090 = vadd.f32 %v2081, %v2089
        %v2091 = vmul.f32 %v2090, 0.7978846
        %v2092 = vtanh.pop %v2091
        %v2093 = vadd.f32 %v2092, 1.0
        %v2094 = vmul.f32 %v2086, %v2093
        %v2095 = vpack.c.bf16 %v2094, %v2094
        %v2096 = vld [vmem:[%s943] sm:$0xf]
        %v2097 = vld [vmem:[%s943 + $0x4] sm:$0xf]
        %v2098 = vld [vmem:[%s943 + $0x8] sm:$0xf]
        %v2099 = vld [vmem:[%s943 + $0xc] sm:$0xf]
        %v2100 = vld [vmem:[%s943 + $0x10] sm:$0xf]
        %v2101 = vld [vmem:[%s943 + $0x14] sm:$0xf]
        %v2102 = vld [vmem:[%s943 + $0x18] sm:$0xf]
        %v2103 = vld [vmem:[%s943 + $0x1c] sm:$0xf]
        %v2104 = vld [vmem:[%s943 + $0x20] sm:$0xf]
        %v2105 = vld [vmem:[%s943 + $0x24] sm:$0xf]
        %v2106 = vld [vmem:[%s943 + $0x28] sm:$0xf]
        %v2107 = vld [vmem:[%s943 + $0x2c] sm:$0xf]
        %v2108 = vld [vmem:[%s943 + $0x30] sm:$0xf]
        %v2109 = vld [vmem:[%s943 + $0x34] sm:$0xf]
        %v2110 = vld [vmem:[%s943 + $0x38] sm:$0xf]
        %v2111 = vld [vmem:[%s943 + $0x3c] sm:$0xf]
        %v2112 = vld [vmem:[%s946] sm:$0x1]
        %v2114 = vlaneseq
        %v2115 = vshrl.u32 %v2114, 7
        %v2116 = vsub.s32 0, %v2115
        %v2117 = vrot.slane %v2112, %v2116
        %v2135 = vunpack.c.l.b16 %v2096
        %v2136 = vunpack.c.l.b16 %v2097
        %v2137 = vunpack.c.l.b16 %v2098
        %v2138 = vunpack.c.l.b16 %v2099
        %v2139 = vunpack.c.l.b16 %v2100
        %v2140 = vunpack.c.l.b16 %v2101
        %v2141 = vunpack.c.l.b16 %v2102
        %v2142 = vunpack.c.l.b16 %v2103
        %v2143 = vunpack.c.l.b16 %v2104
        %v2144 = vunpack.c.l.b16 %v2105
        %v2145 = vunpack.c.l.b16 %v2106
        %v2146 = vunpack.c.l.b16 %v2107
        %v2147 = vunpack.c.l.b16 %v2108
        %v2148 = vunpack.c.l.b16 %v2109
        %v2149 = vunpack.c.l.b16 %v2110
        %v2150 = vunpack.c.l.b16 %v2111
        %v2151 = vpack.c.b16 %v2136, %v2135
        %v2152 = vpack.c.b16 %v2138, %v2137
        %v2153 = vpack.c.b16 %v2140, %v2139
        %v2154 = vpack.c.b16 %v2142, %v2141
        %v2155 = vpack.c.b16 %v2144, %v2143
        %v2156 = vpack.c.b16 %v2146, %v2145
        %v2157 = vpack.c.b16 %v2148, %v2147
        %v2158 = vpack.c.b16 %v2150, %v2149
        %2167 = vmatprep.subr.bf16.mxu0 0
        %2168 = vmatpush1.bf16.msra.mxu0 %v2151
        %2169 = vmatprep.subr.bf16.mxu0 0
        %2170 = vmatpush1.bf16.msra.mxu0 %v2152
        %2171 = vmatprep.subr.bf16.mxu0 0
        %2172 = vmatpush1.bf16.msra.mxu0 %v2153
        %2173 = vmatprep.subr.bf16.mxu0 0
        %2174 = vmatpush1.bf16.msra.mxu0 %v2154
        %2175 = vmatprep.subr.bf16.mxu0 0
        %2176 = vmatpush1.bf16.msra.mxu0 %v2155
        %2177 = vmatprep.subr.bf16.mxu0 0
        %2178 = vmatpush1.bf16.msra.mxu0 %v2156
        %2179 = vmatprep.subr.bf16.mxu0 0
        %2180 = vmatpush1.bf16.msra.mxu0 %v2157
        %2181 = vmatprep.subr.bf16.mxu0 0
        %2182 = vmatpush1.bf16.msra.mxu0 %v2158
        %2183 = vmatprep.subr.bf16.mxu0 0
        %2184 = vmatpush1.bf16.msra.mxu0 0
        %2185 = vmatprep.subr.bf16.mxu0 0
        %2186 = vmatpush1.bf16.msra.mxu0 0
        %2187 = vmatprep.subr.bf16.mxu0 0
        %2188 = vmatpush1.bf16.msra.mxu0 0
        %2189 = vmatprep.subr.bf16.mxu0 0
        %2190 = vmatpush1.bf16.msra.mxu0 0
        %2191 = vmatprep.subr.bf16.mxu0 0
        %2192 = vmatpush1.bf16.msra.mxu0 0
        %2193 = vmatprep.subr.bf16.mxu0 0
        %2194 = vmatpush1.bf16.msra.mxu0 0
        %2195 = vmatprep.subr.bf16.mxu0 0
        %2196 = vmatpush1.bf16.msra.mxu0 0
        %2197 = vmatprep.subr.bf16.mxu0 0
        %2198 = vmatpush1.bf16.msra.mxu0 0
        %2199 = vmatprep.mubr.bf16.mxu0 0
        %2200 = vmatmul.mubr.bf16.gmra.mrb[0].mxu0 %v2095
        %v2201 = vpop.f32.mrb[0].mxu0
        %v2202 = vadd.f32 %v2117, %v2201
        %v2203 = vpop.f32.mrb[0].mxu0
        %v2204 = vpop.f32.mrb[0].mxu0
        %v2205 = vpop.f32.mrb[0].mxu0
        %2206 = vdwg.mxu0
        %v2207 = vadd.f32 %v1989, %v2202
        %2208 = vst.msk [vmem:[#allocation2] sm:$0xff] %vm958, %v2207
        %p2209 = scmp.eq.s32.totalorder %s40, 1
        // Predicated region
        $region109: #{g_encoder_forward.1} parent=103 // pred_check
          %p2210 = pneg %p2209
        $region110: #{g_encoder_forward.1} parent=103 // pred_check_branch
          %2212 = sbr.rel (%p2210) target = $region112
        $region111: #{g_encoder_forward.1} parent=103 // pred_region
          %v2213 = vld [vmem:[%s17] sm:$0x1]
          %v2214 = vld [vmem:[%s18] sm:$0x1]
          %v2215 = vsel %vm958, %v2207, 0.0
          %2216 = vadd.xlane.f32.xlu0 %v2215
          %v2217 = vpop.xlane.xlu0 %2216
          %v2218 = vmul.f32 %v2217, %v962
          %v2219 = vsub.f32 %v2207, %v2218
          %v2220 = vmul.f32 %v2219, %v2219
          %v2221 = vsel %vm958, %v2220, 0.0
          %2222 = vadd.xlane.f32.xlu0 %v2221
          %v2223 = vpop.xlane.xlu0 %2222
          %v2224 = vmul.f32 %v2223, %v962
          %v2225 = vadd.f32 %v2224, 1e-05
          %v2226 = vrsqrt.pop %v2225
          %v2227 = vmul.f32 %v2219, %v2226
          %v2229 = vlaneseq
          %v2230 = vshrl.u32 %v2229, 7
          %v2231 = vsub.s32 0, %v2230
          %v2232 = vrot.slane %v2213, %v2231
          %v2234 = vmul.f32 %v2227, %v2232
          %v2236 = vlaneseq
          %v2237 = vshrl.u32 %v2236, 7
          %v2238 = vsub.s32 0, %v2237
          %v2239 = vrot.slane %v2214, %v2238
          %v2241 = vadd.f32 %v2234, %v2239
          %v2242 = vld [vmem:[%s19] sm:$0x1]
          %v2244 = vlaneseq
          %v2245 = vshrl.u32 %v2244, 7
          %v2246 = vsub.s32 0, %v2245
          %v2247 = vrot.slane %v2242, %v2246
          %v2249 = vmul.f32 %v2241, %v2247
          %v2250 = vsel %vm958, %v2249, 0.0
          %2251 = vadd.xlane.f32.xlu0 %v2250
          %v2252 = vpop.xlane.xlu0 %2251
          %v2253 = vld [vmem:[%s20] sm:$0xff]
          %v2254 = vmul.f32 %v2252, %v2253
          %v2255 = vsel %vm958, %v2254, 0.0
          %v2256 = vrot.slane %v2255, 4
          %v2257 = vadd.f32 %v2255, %v2256
          %v2258 = vrot.slane %v2257, 2
          %v2259 = vadd.f32 %v2257, %v2258
          %v2260 = vrot.slane %v2259, 1
          %v2261 = vadd.f32 %v2259, %v2260
          %vm2262 = vcmask 253952
          %2263 = vst.msk [vmem:[%s874] sm:$0x1] %vm2262, %v2261
        $region112: #{g_encoder_forward.1} parent=103 // pred_fallthru
          _
        %s2264 = sand.u32 %s581, 1
        %s2265 = scalar_lea.sflag [#allocation4], %s2264
        %s2266 = sand.u32 %s581, 1
        %s2267 = scalar_lea.vmem [#allocation3], %s2266
        // Predicated region
        $region113: #{g_encoder_forward.1} parent=103 // pred_check
          %p2268 = pneg %p591
        $region114: #{g_encoder_forward.1} parent=103 // pred_check_branch
          %2270 = sbr.rel (%p2268) target = $region116
        $region115: #{g_encoder_forward.1} parent=103 // pred_region
          %s2272 = ssub.s32 16, 16
          %2273 = vsyncadd %s2265, %s2272
          %s2274 = smul.addr %s39, 16
          %s2275 = scalar_lea.hbm %s21, %s2274
          %s2277 = sshll.u32 %s2267, 4
          %s2278 = int_to_ptr.vmem [resolvable:$true] %s2277
          %2280 = dma.vmem_to_hbm [thread:$0]  %s2278, 16, %s2275, %s2265
        $region116: #{g_encoder_forward.1} parent=103 // pred_fallthru
          _
      $region104: #{g_encoder_forward.1} parent=5 // pred_fallthru
        _
      %p2281 = scmp.le.s32.totalorder 2, %s30
      // Predicated region
      $region117: #{g_encoder_forward.1} parent=5 // pred_check
        %p2282 = pneg %p2281
      $region118: #{g_encoder_forward.1} parent=5 // pred_check_branch
        %2284 = sbr.rel (%p2282) target = $region120
      $region119: #{g_encoder_forward.1} parent=5 // pred_region
        %s2285 = ssub.s32 %s30, 2
        // Predicated region
        $region121: #{g_encoder_forward.1} parent=119 // pred_check
          %p2286 = pneg %p597
        $region122: #{g_encoder_forward.1} parent=119 // pred_check_branch
          %2288 = sbr.rel (%p2286) target = $region124
        $region123: #{g_encoder_forward.1} parent=119 // pred_region
          %s2289 = sand.u32 %s582, 1
          %s2290 = scalar_lea.sflag [#allocation4], %s2289
          %s2291 = sand.u32 %s582, 1
          %s2292 = scalar_lea.vmem [#allocation3], %s2291
          %2293 = dma.done %s2290, 16
        $region124: #{g_encoder_forward.1} parent=119 // pred_fallthru
          _
      $region120: #{g_encoder_forward.1} parent=5 // pred_fallthru
        _
    $region6: #{g_encoder_forward.1} parent=1 // loop_footer
      %s34 = sadd.s32 1, %s30
    $region7: #{g_encoder_forward.1} parent=1 // loop_footer_branch
      %29 = sbr.rel target = $region3
    $region8: #{g_encoder_forward.1} parent=1 // loop_exit
      _
    %2294 = vsyncpa [#allocation4], 1
    %s2295 = scalar_lea.sflag [#allocation4], 1
    %2296 = vsyncpa %s2295, 1

</llo_original>
